<compile_context>
chip_gen: v7x
topology: tpu7x:2x2x1
jax: 0.10.0
libtpu: 0.0.40
codegen_flags: <defaults>
</compile_context>

<pallas_src>
import jax
import jax.numpy as jnp
from jax.experimental import pallas as pl
from jax.experimental.pallas import tpu as pltpu


HIDDEN_DIMS = [1024, 512, 256, 128, 64]
LEAKY_SLOPE = 0.2
BN_EPS = 1e-5
OUT_PAD = 128  # final layer padded from 1 -> 128 output columns


def _leaky_relu(h):
    return jnp.where(h > 0, h, LEAKY_SLOPE * h)


def _round_up(a, m):
    return ((a + m - 1) // m) * m


def discriminator_kernel(x_ref,
                         w1_ref, t1_ref,
                         w2_ref, t2_ref,
                         w3_ref, t3_ref,
                         w4_ref, t4_ref,
                         w5_ref, t5_ref,
                         w6_ref, b6_ref,
                         o_ref):
    # Hidden layers 1..5. BatchNorm (eval) scale is folded into the bf16 weights
    # and Linear bias + BN shift into t, so each layer is: leaky(x @ W' + t).
    # Dropout == identity in eval mode.
    h = x_ref[...]
    for w_ref, t_ref in ((w1_ref, t1_ref), (w2_ref, t2_ref), (w3_ref, t3_ref),
                         (w4_ref, t4_ref), (w5_ref, t5_ref)):
        h = jnp.dot(h.astype(jnp.bfloat16), w_ref[...],
                    preferred_element_type=jnp.float32)
        h = _leaky_relu(h + t_ref[...])

    # Layer 6: Linear(64 -> 1), zero-padded to 128 output columns so the
    # output store is lane-dense (unmasked). Column 0 holds the real result.
    o_ref[...] = jnp.dot(h.astype(jnp.bfloat16), w6_ref[...],
                         preferred_element_type=jnp.float32) + b6_ref[...]


def init_params(key, input_dim):
    """Deterministic synthetic parameters for the Discriminator MLP."""
    dims = [input_dim] + HIDDEN_DIMS + [1]
    params = {}
    keys = jax.random.split(key, 4 * len(dims))
    ki = 0
    for li, (d_in, d_out) in enumerate(zip(dims[:-1], dims[1:])):
        params[f"w{li + 1}"] = (
            jax.random.normal(keys[ki], (d_in, d_out), jnp.float32) * 0.05)
        ki += 1
        params[f"b{li + 1}"] = (
            jax.random.normal(keys[ki], (1, d_out), jnp.float32) * 0.01)
        ki += 1
    # BatchNorm params for hidden layers 2..5 (output dims 512, 256, 128, 64)
    for li, d in zip(range(2, 6), HIDDEN_DIMS[1:]):
        params[f"gamma{li}"] = 1.0 + 0.1 * jax.random.normal(
            keys[ki], (1, d), jnp.float32); ki += 1
        params[f"beta{li}"] = 0.1 * jax.random.normal(
            keys[ki], (1, d), jnp.float32); ki += 1
        # running stats as initialized by PyTorch (mean=0, var=1)
        params[f"rmean{li}"] = jnp.zeros((1, d), jnp.float32)
        params[f"rvar{li}"] = jnp.ones((1, d), jnp.float32)
    return params


def discriminator_forward(x, params):
    B, input_dim = x.shape

    # --- wrapper-side parameter prep (plain JAX glue) --------------------
    # BatchNorm (eval) + preceding Linear bias folded into the weights/shift:
    #   (xW + b - mean) * gamma/sqrt(var+eps) + beta
    # = x (W * s) + (b - mean) * s + beta            with s = gamma/sqrt(var+eps)
    def fold(li):
        inv = jax.lax.rsqrt(params[f"rvar{li}"] + BN_EPS)
        scale = params[f"gamma{li}"] * inv                        # (1, d_out)
        shift = (params[f"beta{li}"] - params[f"rmean{li}"] * scale
                 + params[f"b{li}"] * scale)                      # (1, d_out)
        w = (params[f"w{li}"] * scale).astype(jnp.bfloat16)       # (d_in, d_out)
        return w, shift

    w2, t2 = fold(2)
    w3, t3 = fold(3)
    w4, t4 = fold(4)
    w5, t5 = fold(5)

    # Layer 1: pad input features to a multiple of 128 (lane-dense x tile and
    # MXU-aligned K); extra W1 rows are zero, so the result is unchanged.
    D_pad = _round_up(input_dim, 128)
    w1 = (jnp.zeros((D_pad, HIDDEN_DIMS[0]), jnp.float32)
          .at[:input_dim].set(params["w1"]).astype(jnp.bfloat16))
    t1 = params["b1"]

    # Pad final 64->1 layer to 64->128 so the output tile is lane-dense.
    w6 = (jnp.zeros((HIDDEN_DIMS[-1], OUT_PAD), jnp.float32)
          .at[:, :1].set(params["w6"]).astype(jnp.bfloat16))
    b6 = jnp.zeros((1, OUT_PAD), jnp.float32).at[:, :1].set(params["b6"])

    # Batch tiling: TILE_B rows per grid step; pad the batch to a multiple.
    TILE_B = min(256, _round_up(B, 8))
    B_pad = _round_up(B, TILE_B)
    x_pad = jnp.pad(x, ((0, B_pad - B), (0, D_pad - input_dim)))

    args = [x_pad, w1, t1, w2, t2, w3, t3, w4, t4, w5, t5, w6, b6]

    # x is tiled over the batch; all parameters use a constant index_map so
    # they are DMA'd once and stay VMEM-resident across grid steps.
    in_specs = [pl.BlockSpec((TILE_B, D_pad), lambda i: (i, 0))]
    in_specs += [pl.BlockSpec(a.shape, lambda i: (0, 0)) for a in args[1:]]

    out = pl.pallas_call(
        discriminator_kernel,
        out_shape=jax.ShapeDtypeStruct((B_pad, OUT_PAD), jnp.float32),
        grid=(B_pad // TILE_B,),
        in_specs=in_specs,
        out_specs=pl.BlockSpec((TILE_B, OUT_PAD), lambda i: (i, 0)),
        compiler_params=pltpu.CompilerParams(
            dimension_semantics=("parallel",),
        ),
    )(*args)

    # Strip batch padding and the output-column padding.
    return out[:B, :1]


def reference_forward(x, params):
    """Exact f32 eval-mode forward of the PyTorch module (semantic reference)."""
    h = x @ params["w1"] + params["b1"]
    h = jnp.where(h > 0, h, LEAKY_SLOPE * h)
    for li in range(2, 6):
        h = h @ params[f"w{li}"] + params[f"b{li}"]
        inv = jax.lax.rsqrt(params[f"rvar{li}"] + BN_EPS)
        h = (params[f"gamma{li}"] * (h - params[f"rmean{li}"]) * inv
             + params[f"beta{li}"])
        h = jnp.where(h > 0, h, LEAKY_SLOPE * h)
    return h @ params["w6"] + params["b6"]


if __name__ == "__main__":
    key = jax.random.PRNGKey(0)
    k_params, k_x = jax.random.split(key)

    B = 8           # batch
    INPUT_DIM = 64  # input_dim of the Discriminator

    params = init_params(k_params, INPUT_DIM)
    x = jax.random.normal(k_x, (B, INPUT_DIM), jnp.float32)

    out = discriminator_forward(x, params)
    out = jax.block_until_ready(out)

    ref = reference_forward(x, params)
    assert out.shape == (B, 1), out.shape
    # Tolerance covers the bf16-weight / f32-accumulate recipe vs. the f32 reference.
    assert jnp.allclose(out, ref, atol=2e-2, rtol=2e-2), (
        float(jnp.max(jnp.abs(out - ref))))

    print("KERNEL_OK")
</pallas_src>

<mosaic_0001>
module attributes {stable_mosaic.version = 11 : i64} {
  func.func @discriminator_kernel(%arg0: i32, %arg1: memref<8x128xf32, #tpu.memory_space<vmem>>, %arg2: memref<128x1024xbf16, #tpu.memory_space<vmem>>, %arg3: memref<1x1024xf32, #tpu.memory_space<vmem>>, %arg4: memref<1024x512xbf16, #tpu.memory_space<vmem>>, %arg5: memref<1x512xf32, #tpu.memory_space<vmem>>, %arg6: memref<512x256xbf16, #tpu.memory_space<vmem>>, %arg7: memref<1x256xf32, #tpu.memory_space<vmem>>, %arg8: memref<256x128xbf16, #tpu.memory_space<vmem>>, %arg9: memref<1x128xf32, #tpu.memory_space<vmem>>, %arg10: memref<128x64xbf16, #tpu.memory_space<vmem>>, %arg11: memref<1x64xf32, #tpu.memory_space<vmem>>, %arg12: memref<64x128xbf16, #tpu.memory_space<vmem>>, %arg13: memref<1x128xf32, #tpu.memory_space<vmem>>, %arg14: memref<8x128xf32, #tpu.memory_space<vmem>>) attributes {dimension_semantics = [#tpu.dimension_semantics<parallel>], iteration_bounds = array<i64: 1>, scalar_prefetch = 0 : i64, scratch_operands = 0 : i64, tpu.core_type = #tpu.core_type<tc>, window_params = [{transform_indices = @transform_0, window_bounds = array<i64: 8, 128>}, {pipeline_mode = #tpu.pipeline_mode<synchronous>, transform_indices = @transform_1, window_bounds = array<i64: 128, 1024>}, {pipeline_mode = #tpu.pipeline_mode<synchronous>, transform_indices = @transform_2, window_bounds = array<i64: 1, 1024>}, {pipeline_mode = #tpu.pipeline_mode<synchronous>, transform_indices = @transform_3, window_bounds = array<i64: 1024, 512>}, {pipeline_mode = #tpu.pipeline_mode<synchronous>, transform_indices = @transform_4, window_bounds = array<i64: 1, 512>}, {pipeline_mode = #tpu.pipeline_mode<synchronous>, transform_indices = @transform_5, window_bounds = array<i64: 512, 256>}, {pipeline_mode = #tpu.pipeline_mode<synchronous>, transform_indices = @transform_6, window_bounds = array<i64: 1, 256>}, {pipeline_mode = #tpu.pipeline_mode<synchronous>, transform_indices = @transform_7, window_bounds = array<i64: 256, 128>}, {pipeline_mode = #tpu.pipeline_mode<synchronous>, transform_indices = @transform_8, window_bounds = array<i64: 1, 128>}, {pipeline_mode = #tpu.pipeline_mode<synchronous>, transform_indices = @transform_9, window_bounds = array<i64: 128, 64>}, {pipeline_mode = #tpu.pipeline_mode<synchronous>, transform_indices = @transform_10, window_bounds = array<i64: 1, 64>}, {pipeline_mode = #tpu.pipeline_mode<synchronous>, transform_indices = @transform_11, window_bounds = array<i64: 64, 128>}, {pipeline_mode = #tpu.pipeline_mode<synchronous>, transform_indices = @transform_12, window_bounds = array<i64: 1, 128>}, {transform_indices = @transform_13, window_bounds = array<i64: 8, 128>}]} {
    %c0 = arith.constant 0 : index
    %c0_0 = arith.constant 0 : index
    %0 = vector.load %arg1[%c0, %c0_0] : memref<8x128xf32, #tpu.memory_space<vmem>>, vector<8x128xf32>
    %1 = arith.truncf %0 : vector<8x128xf32> to vector<8x128xbf16>
    %c0_1 = arith.constant 0 : index
    %c0_2 = arith.constant 0 : index
    %2 = vector.load %arg2[%c0_1, %c0_2] : memref<128x1024xbf16, #tpu.memory_space<vmem>>, vector<128x1024xbf16>
    %cst = arith.constant dense<0.000000e+00> : vector<8x1024xf32>
    %3 = tpu.matmul %1, %2, %cst {dimension_numbers = #tpu.dot_dimension_numbers<[1], [0], [0], [1], [0, 0, 1, 1], [], []>} : vector<8x128xbf16>, vector<128x1024xbf16>, vector<8x1024xf32> -> vector<8x1024xf32>
    %c0_3 = arith.constant 0 : index
    %c0_4 = arith.constant 0 : index
    %4 = vector.load %arg3[%c0_3, %c0_4] : memref<1x1024xf32, #tpu.memory_space<vmem>>, vector<1x1024xf32>
    %5 = vector.broadcast %4 : vector<1x1024xf32> to vector<8x1024xf32>
    %6 = arith.addf %3, %5 : vector<8x1024xf32>
    %cst_5 = arith.constant 0.000000e+00 : f32
    %7 = vector.broadcast %cst_5 : f32 to vector<8x1024xf32>
    %8 = arith.cmpf ogt, %6, %7 : vector<8x1024xf32>
    %cst_6 = arith.constant 2.000000e-01 : f32
    %9 = vector.broadcast %cst_6 : f32 to vector<8x1024xf32>
    %10 = arith.mulf %9, %6 : vector<8x1024xf32>
    %11 = arith.select %8, %6, %10 : vector<8x1024xi1>, vector<8x1024xf32>
    %12 = arith.truncf %11 : vector<8x1024xf32> to vector<8x1024xbf16>
    %c0_7 = arith.constant 0 : index
    %c0_8 = arith.constant 0 : index
    %13 = vector.load %arg4[%c0_7, %c0_8] : memref<1024x512xbf16, #tpu.memory_space<vmem>>, vector<1024x512xbf16>
    %cst_9 = arith.constant dense<0.000000e+00> : vector<8x512xf32>
    %14 = tpu.matmul %12, %13, %cst_9 {dimension_numbers = #tpu.dot_dimension_numbers<[1], [0], [0], [1], [0, 0, 1, 1], [], []>} : vector<8x1024xbf16>, vector<1024x512xbf16>, vector<8x512xf32> -> vector<8x512xf32>
    %c0_10 = arith.constant 0 : index
    %c0_11 = arith.constant 0 : index
    %15 = vector.load %arg5[%c0_10, %c0_11] : memref<1x512xf32, #tpu.memory_space<vmem>>, vector<1x512xf32>
    %16 = vector.broadcast %15 : vector<1x512xf32> to vector<8x512xf32>
    %17 = arith.addf %14, %16 : vector<8x512xf32>
    %cst_12 = arith.constant 0.000000e+00 : f32
    %18 = vector.broadcast %cst_12 : f32 to vector<8x512xf32>
    %19 = arith.cmpf ogt, %17, %18 : vector<8x512xf32>
    %cst_13 = arith.constant 2.000000e-01 : f32
    %20 = vector.broadcast %cst_13 : f32 to vector<8x512xf32>
    %21 = arith.mulf %20, %17 : vector<8x512xf32>
    %22 = arith.select %19, %17, %21 : vector<8x512xi1>, vector<8x512xf32>
    %23 = arith.truncf %22 : vector<8x512xf32> to vector<8x512xbf16>
    %c0_14 = arith.constant 0 : index
    %c0_15 = arith.constant 0 : index
    %24 = vector.load %arg6[%c0_14, %c0_15] : memref<512x256xbf16, #tpu.memory_space<vmem>>, vector<512x256xbf16>
    %cst_16 = arith.constant dense<0.000000e+00> : vector<8x256xf32>
    %25 = tpu.matmul %23, %24, %cst_16 {dimension_numbers = #tpu.dot_dimension_numbers<[1], [0], [0], [1], [0, 0, 1, 1], [], []>} : vector<8x512xbf16>, vector<512x256xbf16>, vector<8x256xf32> -> vector<8x256xf32>
    %c0_17 = arith.constant 0 : index
    %c0_18 = arith.constant 0 : index
    %26 = vector.load %arg7[%c0_17, %c0_18] : memref<1x256xf32, #tpu.memory_space<vmem>>, vector<1x256xf32>
    %27 = vector.broadcast %26 : vector<1x256xf32> to vector<8x256xf32>
    %28 = arith.addf %25, %27 : vector<8x256xf32>
    %cst_19 = arith.constant 0.000000e+00 : f32
    %29 = vector.broadcast %cst_19 : f32 to vector<8x256xf32>
    %30 = arith.cmpf ogt, %28, %29 : vector<8x256xf32>
    %cst_20 = arith.constant 2.000000e-01 : f32
    %31 = vector.broadcast %cst_20 : f32 to vector<8x256xf32>
    %32 = arith.mulf %31, %28 : vector<8x256xf32>
    %33 = arith.select %30, %28, %32 : vector<8x256xi1>, vector<8x256xf32>
    %34 = arith.truncf %33 : vector<8x256xf32> to vector<8x256xbf16>
    %c0_21 = arith.constant 0 : index
    %c0_22 = arith.constant 0 : index
    %35 = vector.load %arg8[%c0_21, %c0_22] : memref<256x128xbf16, #tpu.memory_space<vmem>>, vector<256x128xbf16>
    %cst_23 = arith.constant dense<0.000000e+00> : vector<8x128xf32>
    %36 = tpu.matmul %34, %35, %cst_23 {dimension_numbers = #tpu.dot_dimension_numbers<[1], [0], [0], [1], [0, 0, 1, 1], [], []>} : vector<8x256xbf16>, vector<256x128xbf16>, vector<8x128xf32> -> vector<8x128xf32>
    %c0_24 = arith.constant 0 : index
    %c0_25 = arith.constant 0 : index
    %37 = vector.load %arg9[%c0_24, %c0_25] : memref<1x128xf32, #tpu.memory_space<vmem>>, vector<1x128xf32>
    %38 = vector.broadcast %37 : vector<1x128xf32> to vector<8x128xf32>
    %39 = arith.addf %36, %38 : vector<8x128xf32>
    %cst_26 = arith.constant 0.000000e+00 : f32
    %40 = vector.broadcast %cst_26 : f32 to vector<8x128xf32>
    %41 = arith.cmpf ogt, %39, %40 : vector<8x128xf32>
    %cst_27 = arith.constant 2.000000e-01 : f32
    %42 = vector.broadcast %cst_27 : f32 to vector<8x128xf32>
    %43 = arith.mulf %42, %39 : vector<8x128xf32>
    %44 = arith.select %41, %39, %43 : vector<8x128xi1>, vector<8x128xf32>
    %45 = arith.truncf %44 : vector<8x128xf32> to vector<8x128xbf16>
    %c0_28 = arith.constant 0 : index
    %c0_29 = arith.constant 0 : index
    %46 = vector.load %arg10[%c0_28, %c0_29] : memref<128x64xbf16, #tpu.memory_space<vmem>>, vector<128x64xbf16>
    %cst_30 = arith.constant dense<0.000000e+00> : vector<8x64xf32>
    %47 = tpu.matmul %45, %46, %cst_30 {dimension_numbers = #tpu.dot_dimension_numbers<[1], [0], [0], [1], [0, 0, 1, 1], [], []>} : vector<8x128xbf16>, vector<128x64xbf16>, vector<8x64xf32> -> vector<8x64xf32>
    %c0_31 = arith.constant 0 : index
    %c0_32 = arith.constant 0 : index
    %48 = vector.load %arg11[%c0_31, %c0_32] : memref<1x64xf32, #tpu.memory_space<vmem>>, vector<1x64xf32>
    %49 = vector.broadcast %48 : vector<1x64xf32> to vector<8x64xf32>
    %50 = arith.addf %47, %49 : vector<8x64xf32>
    %cst_33 = arith.constant 0.000000e+00 : f32
    %51 = vector.broadcast %cst_33 : f32 to vector<8x64xf32>
    %52 = arith.cmpf ogt, %50, %51 : vector<8x64xf32>
    %cst_34 = arith.constant 2.000000e-01 : f32
    %53 = vector.broadcast %cst_34 : f32 to vector<8x64xf32>
    %54 = arith.mulf %53, %50 : vector<8x64xf32>
    %55 = arith.select %52, %50, %54 : vector<8x64xi1>, vector<8x64xf32>
    %56 = arith.truncf %55 : vector<8x64xf32> to vector<8x64xbf16>
    %c0_35 = arith.constant 0 : index
    %c0_36 = arith.constant 0 : index
    %57 = vector.load %arg12[%c0_35, %c0_36] : memref<64x128xbf16, #tpu.memory_space<vmem>>, vector<64x128xbf16>
    %cst_37 = arith.constant dense<0.000000e+00> : vector<8x128xf32>
    %58 = tpu.matmul %56, %57, %cst_37 {dimension_numbers = #tpu.dot_dimension_numbers<[1], [0], [0], [1], [0, 0, 1, 1], [], []>} : vector<8x64xbf16>, vector<64x128xbf16>, vector<8x128xf32> -> vector<8x128xf32>
    %c0_38 = arith.constant 0 : index
    %c0_39 = arith.constant 0 : index
    %59 = vector.load %arg13[%c0_38, %c0_39] : memref<1x128xf32, #tpu.memory_space<vmem>>, vector<1x128xf32>
    %60 = vector.broadcast %59 : vector<1x128xf32> to vector<8x128xf32>
    %61 = arith.addf %58, %60 : vector<8x128xf32>
    %c0_40 = arith.constant 0 : index
    %c0_41 = arith.constant 0 : index
    %62 = vector.load %arg14[%c0_40, %c0_41] : memref<8x128xf32, #tpu.memory_space<vmem>>, vector<8x128xf32>
    tpu.vector_store %arg14[%c0_40, %c0_41], %61 {strides = array<i32>} : memref<8x128xf32, #tpu.memory_space<vmem>>, vector<8x128xf32>,
    return
  }
  func.func @transform_0(%arg0: i32) -> (i32, i32) {
    %c0_i32 = arith.constant 0 : i32
    %c0_i32_0 = arith.constant 0 : i32
    return %arg0, %c0_i32 : i32, i32
  }
  func.func @transform_1(%arg0: i32) -> (i32, i32) {
    %c0_i32 = arith.constant 0 : i32
    %c0_i32_0 = arith.constant 0 : i32
    %c0_i32_1 = arith.constant 0 : i32
    return %c0_i32, %c0_i32_0 : i32, i32
  }
  func.func @transform_2(%arg0: i32) -> (i32, i32) {
    %c0_i32 = arith.constant 0 : i32
    %c0_i32_0 = arith.constant 0 : i32
    %c0_i32_1 = arith.constant 0 : i32
    return %c0_i32, %c0_i32_0 : i32, i32
  }
  func.func @transform_3(%arg0: i32) -> (i32, i32) {
    %c0_i32 = arith.constant 0 : i32
    %c0_i32_0 = arith.constant 0 : i32
    %c0_i32_1 = arith.constant 0 : i32
    return %c0_i32, %c0_i32_0 : i32, i32
  }
  func.func @transform_4(%arg0: i32) -> (i32, i32) {
    %c0_i32 = arith.constant 0 : i32
    %c0_i32_0 = arith.constant 0 : i32
    %c0_i32_1 = arith.constant 0 : i32
    return %c0_i32, %c0_i32_0 : i32, i32
  }
  func.func @transform_5(%arg0: i32) -> (i32, i32) {
    %c0_i32 = arith.constant 0 : i32
    %c0_i32_0 = arith.constant 0 : i32
    %c0_i32_1 = arith.constant 0 : i32
    return %c0_i32, %c0_i32_0 : i32, i32
  }
  func.func @transform_6(%arg0: i32) -> (i32, i32) {
    %c0_i32 = arith.constant 0 : i32
    %c0_i32_0 = arith.constant 0 : i32
    %c0_i32_1 = arith.constant 0 : i32
    return %c0_i32, %c0_i32_0 : i32, i32
  }
  func.func @transform_7(%arg0: i32) -> (i32, i32) {
    %c0_i32 = arith.constant 0 : i32
    %c0_i32_0 = arith.constant 0 : i32
    %c0_i32_1 = arith.constant 0 : i32
    return %c0_i32, %c0_i32_0 : i32, i32
  }
  func.func @transform_8(%arg0: i32) -> (i32, i32) {
    %c0_i32 = arith.constant 0 : i32
    %c0_i32_0 = arith.constant 0 : i32
    %c0_i32_1 = arith.constant 0 : i32
    return %c0_i32, %c0_i32_0 : i32, i32
  }
  func.func @transform_9(%arg0: i32) -> (i32, i32) {
    %c0_i32 = arith.constant 0 : i32
    %c0_i32_0 = arith.constant 0 : i32
    %c0_i32_1 = arith.constant 0 : i32
    return %c0_i32, %c0_i32_0 : i32, i32
  }
  func.func @transform_10(%arg0: i32) -> (i32, i32) {
    %c0_i32 = arith.constant 0 : i32
    %c0_i32_0 = arith.constant 0 : i32
    %c0_i32_1 = arith.constant 0 : i32
    return %c0_i32, %c0_i32_0 : i32, i32
  }
  func.func @transform_11(%arg0: i32) -> (i32, i32) {
    %c0_i32 = arith.constant 0 : i32
    %c0_i32_0 = arith.constant 0 : i32
    %c0_i32_1 = arith.constant 0 : i32
    return %c0_i32, %c0_i32_0 : i32, i32
  }
  func.func @transform_12(%arg0: i32) -> (i32, i32) {
    %c0_i32 = arith.constant 0 : i32
    %c0_i32_0 = arith.constant 0 : i32
    %c0_i32_1 = arith.constant 0 : i32
    return %c0_i32, %c0_i32_0 : i32, i32
  }
  func.func @transform_13(%arg0: i32) -> (i32, i32) {
    %c0_i32 = arith.constant 0 : i32
    %c0_i32_0 = arith.constant 0 : i32
    return %arg0, %c0_i32 : i32, i32
  }
}

</mosaic_0001>

<llo_original>
// kernel: tpu_custom_call.1
$region0: #{tpu_custom_call.1}
  #allocation0 [shape = 'u32[]', space=smem, size = 0x4, offset = 0x4, fixed_abs, tag = 'smem constant byte address 0x4 - core index']
  #allocation1 [shape = 'u32[144,128]{1,0:T(1,128)}', space=vmem, size = 0x12000, scoped, tag = 'internal scratch']
  %s0 = inlined_call_operand.vmem [shape: f32[8,128], index: 0, kind: input, shape index: {}]
  %s1 = inlined_call_operand.hbm [shape: bf16[128,1024], index: 1, kind: input, shape index: {}]
  %s2 = inlined_call_operand.vmem [shape: f32[1,1024], index: 2, kind: input, shape index: {}]
  %s3 = inlined_call_operand.hbm [shape: bf16[1024,512], index: 3, kind: input, shape index: {}]
  %s4 = inlined_call_operand.vmem [shape: f32[1,512], index: 4, kind: input, shape index: {}]
  %s5 = inlined_call_operand.hbm [shape: bf16[512,256], index: 5, kind: input, shape index: {}]
  %s6 = inlined_call_operand.vmem [shape: f32[1,256], index: 6, kind: input, shape index: {}]
  %s7 = inlined_call_operand.hbm [shape: bf16[256,128], index: 7, kind: input, shape index: {}]
  %s8 = inlined_call_operand.vmem [shape: f32[1,128], index: 8, kind: input, shape index: {}]
  %s9 = inlined_call_operand.vmem [shape: bf16[128,64], index: 9, kind: input, shape index: {}]
  %s10 = inlined_call_operand.vmem [shape: f32[1,64], index: 10, kind: input, shape index: {}]
  %s11 = inlined_call_operand.vmem [shape: bf16[64,128], index: 11, kind: input, shape index: {}]
  %s12 = inlined_call_operand.vmem [shape: f32[1,128], index: 12, kind: input, shape index: {}]
  %s13 = inlined_call_operand.hbm [shape: f32[8,128], index: 13, kind: output, shape index: {}]
  %s14 = sld [smem:[#allocation0]]
  $region78: #{tpu_custom_call.1} parent=0
    _
  %s16 = ssub.s32 1, %s14
  %s17 = scalar_select 0, %s16, %s14
  $region1: #{tpu_custom_call.1} parent=0
    #allocation2 [shape = 'u8[262144]{0}', space=vmem, size = 0x40000, scoped, tag = 'input window, operand 1, single buffered']
    #allocation3 [shape = 's32[1]{0}', space=sflag, size = 0x4, scoped, tag = 'scoped memory for tpu_custom_call.1']
    #allocation4 [shape = 's32[1]{0}', space=sflag, size = 0x4, scoped, tag = 'scoped memory for tpu_custom_call.1']
    #allocation5 [shape = 'u8[1048576]{0}', space=vmem, size = 0x100000, scoped, tag = 'input window, operand 3, single buffered']
    #allocation6 [shape = 's32[1]{0}', space=sflag, size = 0x4, scoped, tag = 'scoped memory for tpu_custom_call.1']
    #allocation7 [shape = 'u8[262144]{0}', space=vmem, size = 0x40000, scoped, tag = 'input window, operand 5, single buffered']
    #allocation8 [shape = 'u8[65536]{0}', space=vmem, size = 0x10000, scoped, tag = 'input window, operand 7, single buffered']
    #allocation9 [shape = 's32[1]{0}', space=sflag, size = 0x4, scoped, tag = 'scoped memory for tpu_custom_call.1']
    #allocation10 [shape = 'u8[4096]{0}', space=vmem, size = 0x1000, scoped, tag = 'output window, operand 0, single buffered']
    %18 = vsyncpa [#allocation3], 0
    %19 = vsyncpa [#allocation6], 0
    %20 = vsyncpa [#allocation9], 0
    %21 = vsyncpa [#allocation4], 0
    // Predicated region
    $region2: #{tpu_custom_call.1} parent=1 // pred_check
      _
    $region3: #{tpu_custom_call.1} parent=1 // pred_check_branch
      %23 = sbr.rel (0) target = $region5
    $region4: #{tpu_custom_call.1} parent=1 // pred_region
      _
    $region5: #{tpu_custom_call.1} parent=1 // pred_fallthru
      _
    // Predicated region
    $region6: #{tpu_custom_call.1} parent=1 // pred_check
      _
    $region7: #{tpu_custom_call.1} parent=1 // pred_check_branch
      %25 = sbr.rel (0) target = $region9
    $region8: #{tpu_custom_call.1} parent=1 // pred_region
      %s27 = ssub.s32 8192, 8192
      %28 = vsyncadd [#allocation3], %s27
      %s29 = sshll.u32 [#allocation2], 4
      %s30 = int_to_ptr.vmem [resolvable:$true] %s29
      %35 = dma.hbm_to_vmem [thread:$0]  %s1, 8192, %s30, [#allocation3], 512, 512, 32
    $region9: #{tpu_custom_call.1} parent=1 // pred_fallthru
      _
    // Predicated region
    $region10: #{tpu_custom_call.1} parent=1 // pred_check
      _
    $region11: #{tpu_custom_call.1} parent=1 // pred_check_branch
      %37 = sbr.rel (0) target = $region13
    $region12: #{tpu_custom_call.1} parent=1 // pred_region
      _
    $region13: #{tpu_custom_call.1} parent=1 // pred_fallthru
      _
    // Predicated region
    $region14: #{tpu_custom_call.1} parent=1 // pred_check
      _
    $region15: #{tpu_custom_call.1} parent=1 // pred_check_branch
      %39 = sbr.rel (0) target = $region17
    $region16: #{tpu_custom_call.1} parent=1 // pred_region
      %s41 = ssub.s32 32768, 32768
      %42 = vsyncadd [#allocation6], %s41
      %s43 = sshll.u32 [#allocation5], 4
      %s44 = int_to_ptr.vmem [resolvable:$true] %s43
      %49 = dma.hbm_to_vmem [thread:$0]  %s3, 32768, %s44, [#allocation6], 256, 256, 16
    $region17: #{tpu_custom_call.1} parent=1 // pred_fallthru
      _
    // Predicated region
    $region18: #{tpu_custom_call.1} parent=1 // pred_check
      _
    $region19: #{tpu_custom_call.1} parent=1 // pred_check_branch
      %51 = sbr.rel (0) target = $region21
    $region20: #{tpu_custom_call.1} parent=1 // pred_region
      _
    $region21: #{tpu_custom_call.1} parent=1 // pred_fallthru
      _
    // Predicated region
    $region22: #{tpu_custom_call.1} parent=1 // pred_check
      _
    $region23: #{tpu_custom_call.1} parent=1 // pred_check_branch
      %53 = sbr.rel (0) target = $region25
    $region24: #{tpu_custom_call.1} parent=1 // pred_region
      %s55 = ssub.s32 8192, 8192
      %56 = vsyncadd [#allocation6], %s55
      %s57 = sshll.u32 [#allocation7], 4
      %s58 = int_to_ptr.vmem [resolvable:$true] %s57
      %63 = dma.hbm_to_vmem [thread:$0]  %s5, 8192, %s58, [#allocation6], 128, 128, 8
    $region25: #{tpu_custom_call.1} parent=1 // pred_fallthru
      _
    // Predicated region
    $region26: #{tpu_custom_call.1} parent=1 // pred_check
      _
    $region27: #{tpu_custom_call.1} parent=1 // pred_check_branch
      %65 = sbr.rel (0) target = $region29
    $region28: #{tpu_custom_call.1} parent=1 // pred_region
      _
    $region29: #{tpu_custom_call.1} parent=1 // pred_fallthru
      _
    // Predicated region
    $region30: #{tpu_custom_call.1} parent=1 // pred_check
      _
    $region31: #{tpu_custom_call.1} parent=1 // pred_check_branch
      %67 = sbr.rel (0) target = $region33
    $region32: #{tpu_custom_call.1} parent=1 // pred_region
      %s69 = ssub.s32 2048, 2048
      %70 = vsyncadd [#allocation9], %s69
      %s71 = sshll.u32 [#allocation8], 4
      %s72 = int_to_ptr.vmem [resolvable:$true] %s71
      %77 = dma.hbm_to_vmem [thread:$0]  %s7, 2048, %s72, [#allocation9], 64, 64, 4
    $region33: #{tpu_custom_call.1} parent=1 // pred_fallthru
      _
    // Predicated region
    $region34: #{tpu_custom_call.1} parent=1 // pred_check
      _
    $region35: #{tpu_custom_call.1} parent=1 // pred_check_branch
      %79 = sbr.rel (0) target = $region37
    $region36: #{tpu_custom_call.1} parent=1 // pred_region
      _
    $region37: #{tpu_custom_call.1} parent=1 // pred_fallthru
      _
    // Predicated region
    $region38: #{tpu_custom_call.1} parent=1 // pred_check
      _
    $region39: #{tpu_custom_call.1} parent=1 // pred_check_branch
      %81 = sbr.rel (0) target = $region41
    $region40: #{tpu_custom_call.1} parent=1 // pred_region
      _
    $region41: #{tpu_custom_call.1} parent=1 // pred_fallthru
      _
    // Predicated region
    $region42: #{tpu_custom_call.1} parent=1 // pred_check
      _
    $region43: #{tpu_custom_call.1} parent=1 // pred_check_branch
      %83 = sbr.rel (0) target = $region45
    $region44: #{tpu_custom_call.1} parent=1 // pred_region
      _
    $region45: #{tpu_custom_call.1} parent=1 // pred_fallthru
      _
    // Predicated region
    $region46: #{tpu_custom_call.1} parent=1 // pred_check
      _
    $region47: #{tpu_custom_call.1} parent=1 // pred_check_branch
      %85 = sbr.rel (0) target = $region49
    $region48: #{tpu_custom_call.1} parent=1 // pred_region
      _
    $region49: #{tpu_custom_call.1} parent=1 // pred_fallthru
      _
    // Predicated region
    $region50: #{tpu_custom_call.1} parent=1 // pred_check
      _
    $region51: #{tpu_custom_call.1} parent=1 // pred_check_branch
      %87 = sbr.rel (0) target = $region53
    $region52: #{tpu_custom_call.1} parent=1 // pred_region
      _
    $region53: #{tpu_custom_call.1} parent=1 // pred_fallthru
      _
    // Predicated region
    $region54: #{tpu_custom_call.1} parent=1 // pred_check
      _
    $region55: #{tpu_custom_call.1} parent=1 // pred_check_branch
      %89 = sbr.rel (0) target = $region57
    $region56: #{tpu_custom_call.1} parent=1 // pred_region
      %90 = dma.done [#allocation3], 8192
    $region57: #{tpu_custom_call.1} parent=1 // pred_fallthru
      _
    // Predicated region
    $region58: #{tpu_custom_call.1} parent=1 // pred_check
      _
    $region59: #{tpu_custom_call.1} parent=1 // pred_check_branch
      %92 = sbr.rel (0) target = $region61
    $region60: #{tpu_custom_call.1} parent=1 // pred_region
      %93 = dma.done [#allocation6], 32768
    $region61: #{tpu_custom_call.1} parent=1 // pred_fallthru
      _
    // Predicated region
    $region62: #{tpu_custom_call.1} parent=1 // pred_check
      _
    $region63: #{tpu_custom_call.1} parent=1 // pred_check_branch
      %95 = sbr.rel (0) target = $region65
    $region64: #{tpu_custom_call.1} parent=1 // pred_region
      %96 = dma.done [#allocation6], 8192
    $region65: #{tpu_custom_call.1} parent=1 // pred_fallthru
      _
    // Predicated region
    $region66: #{tpu_custom_call.1} parent=1 // pred_check
      _
    $region67: #{tpu_custom_call.1} parent=1 // pred_check_branch
      %98 = sbr.rel (0) target = $region69
    $region68: #{tpu_custom_call.1} parent=1 // pred_region
      %99 = dma.done [#allocation9], 2048
    $region69: #{tpu_custom_call.1} parent=1 // pred_fallthru
      _
    %v101 = vld [vmem:[%s0] sm:$0xff]
    %v102 = vpack.c.bf16 %v101, %v101
    %v103 = vld [vmem:[#allocation2] sm:$0xff]
    %v104 = vld [vmem:[#allocation2 + $0x8] sm:$0xff]
    %v105 = vld [vmem:[#allocation2 + $0x10] sm:$0xff]
    %v106 = vld [vmem:[#allocation2 + $0x18] sm:$0xff]
    %v107 = vld [vmem:[#allocation2 + $0x20] sm:$0xff]
    %v108 = vld [vmem:[#allocation2 + $0x28] sm:$0xff]
    %v109 = vld [vmem:[#allocation2 + $0x30] sm:$0xff]
    %v110 = vld [vmem:[#allocation2 + $0x38] sm:$0xff]
    %v111 = vld [vmem:[#allocation2 + $0x40] sm:$0xff]
    %v112 = vld [vmem:[#allocation2 + $0x48] sm:$0xff]
    %v113 = vld [vmem:[#allocation2 + $0x50] sm:$0xff]
    %v114 = vld [vmem:[#allocation2 + $0x58] sm:$0xff]
    %v115 = vld [vmem:[#allocation2 + $0x60] sm:$0xff]
    %v116 = vld [vmem:[#allocation2 + $0x68] sm:$0xff]
    %v117 = vld [vmem:[#allocation2 + $0x70] sm:$0xff]
    %v118 = vld [vmem:[#allocation2 + $0x78] sm:$0xff]
    %v119 = vld [vmem:[#allocation2 + $0x80] sm:$0xff]
    %v120 = vld [vmem:[#allocation2 + $0x88] sm:$0xff]
    %v121 = vld [vmem:[#allocation2 + $0x90] sm:$0xff]
    %v122 = vld [vmem:[#allocation2 + $0x98] sm:$0xff]
    %v123 = vld [vmem:[#allocation2 + $0xa0] sm:$0xff]
    %v124 = vld [vmem:[#allocation2 + $0xa8] sm:$0xff]
    %v125 = vld [vmem:[#allocation2 + $0xb0] sm:$0xff]
    %v126 = vld [vmem:[#allocation2 + $0xb8] sm:$0xff]
    %v127 = vld [vmem:[#allocation2 + $0xc0] sm:$0xff]
    %v128 = vld [vmem:[#allocation2 + $0xc8] sm:$0xff]
    %v129 = vld [vmem:[#allocation2 + $0xd0] sm:$0xff]
    %v130 = vld [vmem:[#allocation2 + $0xd8] sm:$0xff]
    %v131 = vld [vmem:[#allocation2 + $0xe0] sm:$0xff]
    %v132 = vld [vmem:[#allocation2 + $0xe8] sm:$0xff]
    %v133 = vld [vmem:[#allocation2 + $0xf0] sm:$0xff]
    %v134 = vld [vmem:[#allocation2 + $0xf8] sm:$0xff]
    %v135 = vld [vmem:[#allocation2 + $0x100] sm:$0xff]
    %v136 = vld [vmem:[#allocation2 + $0x108] sm:$0xff]
    %v137 = vld [vmem:[#allocation2 + $0x110] sm:$0xff]
    %v138 = vld [vmem:[#allocation2 + $0x118] sm:$0xff]
    %v139 = vld [vmem:[#allocation2 + $0x120] sm:$0xff]
    %v140 = vld [vmem:[#allocation2 + $0x128] sm:$0xff]
    %v141 = vld [vmem:[#allocation2 + $0x130] sm:$0xff]
    %v142 = vld [vmem:[#allocation2 + $0x138] sm:$0xff]
    %v143 = vld [vmem:[#allocation2 + $0x140] sm:$0xff]
    %v144 = vld [vmem:[#allocation2 + $0x148] sm:$0xff]
    %v145 = vld [vmem:[#allocation2 + $0x150] sm:$0xff]
    %v146 = vld [vmem:[#allocation2 + $0x158] sm:$0xff]
    %v147 = vld [vmem:[#allocation2 + $0x160] sm:$0xff]
    %v148 = vld [vmem:[#allocation2 + $0x168] sm:$0xff]
    %v149 = vld [vmem:[#allocation2 + $0x170] sm:$0xff]
    %v150 = vld [vmem:[#allocation2 + $0x178] sm:$0xff]
    %v151 = vld [vmem:[#allocation2 + $0x180] sm:$0xff]
    %v152 = vld [vmem:[#allocation2 + $0x188] sm:$0xff]
    %v153 = vld [vmem:[#allocation2 + $0x190] sm:$0xff]
    %v154 = vld [vmem:[#allocation2 + $0x198] sm:$0xff]
    %v155 = vld [vmem:[#allocation2 + $0x1a0] sm:$0xff]
    %v156 = vld [vmem:[#allocation2 + $0x1a8] sm:$0xff]
    %v157 = vld [vmem:[#allocation2 + $0x1b0] sm:$0xff]
    %v158 = vld [vmem:[#allocation2 + $0x1b8] sm:$0xff]
    %v159 = vld [vmem:[#allocation2 + $0x1c0] sm:$0xff]
    %v160 = vld [vmem:[#allocation2 + $0x1c8] sm:$0xff]
    %v161 = vld [vmem:[#allocation2 + $0x1d0] sm:$0xff]
    %v162 = vld [vmem:[#allocation2 + $0x1d8] sm:$0xff]
    %v163 = vld [vmem:[#allocation2 + $0x1e0] sm:$0xff]
    %v164 = vld [vmem:[#allocation2 + $0x1e8] sm:$0xff]
    %v165 = vld [vmem:[#allocation2 + $0x1f0] sm:$0xff]
    %v166 = vld [vmem:[#allocation2 + $0x1f8] sm:$0xff]
    %v167 = vld [vmem:[%s2] sm:$0xff]
    %v169 = vlaneseq
    %v170 = vshrl.u32 %v169, 7
    %v171 = vsub.s32 0, %v170
    %v172 = vrot.slane %v167, %v171
    %v173 = vlaneseq
    %v174 = vshrl.u32 %v173, 7
    %v175 = vsub.s32 1, %v174
    %v176 = vrot.slane %v167, %v175
    %v177 = vlaneseq
    %v178 = vshrl.u32 %v177, 7
    %v179 = vsub.s32 2, %v178
    %v180 = vrot.slane %v167, %v179
    %v181 = vlaneseq
    %v182 = vshrl.u32 %v181, 7
    %v183 = vsub.s32 3, %v182
    %v184 = vrot.slane %v167, %v183
    %v185 = vlaneseq
    %v186 = vshrl.u32 %v185, 7
    %v187 = vsub.s32 4, %v186
    %v188 = vrot.slane %v167, %v187
    %v189 = vlaneseq
    %v190 = vshrl.u32 %v189, 7
    %v191 = vsub.s32 5, %v190
    %v192 = vrot.slane %v167, %v191
    %v193 = vlaneseq
    %v194 = vshrl.u32 %v193, 7
    %v195 = vsub.s32 6, %v194
    %v196 = vrot.slane %v167, %v195
    %v197 = vlaneseq
    %v198 = vshrl.u32 %v197, 7
    %v199 = vsub.s32 7, %v198
    %v200 = vrot.slane %v167, %v199
    %v273 = vunpack.c.l.b16 %v103
    %v274 = vunpack.c.h.b16 %v103
    %v275 = vunpack.c.l.b16 %v104
    %v276 = vunpack.c.h.b16 %v104
    %v277 = vunpack.c.l.b16 %v105
    %v278 = vunpack.c.h.b16 %v105
    %v279 = vunpack.c.l.b16 %v106
    %v280 = vunpack.c.h.b16 %v106
    %v281 = vunpack.c.l.b16 %v107
    %v282 = vunpack.c.h.b16 %v107
    %v283 = vunpack.c.l.b16 %v108
    %v284 = vunpack.c.h.b16 %v108
    %v285 = vunpack.c.l.b16 %v109
    %v286 = vunpack.c.h.b16 %v109
    %v287 = vunpack.c.l.b16 %v110
    %v288 = vunpack.c.h.b16 %v110
    %v289 = vunpack.c.l.b16 %v111
    %v290 = vunpack.c.h.b16 %v111
    %v291 = vunpack.c.l.b16 %v112
    %v292 = vunpack.c.h.b16 %v112
    %v293 = vunpack.c.l.b16 %v113
    %v294 = vunpack.c.h.b16 %v113
    %v295 = vunpack.c.l.b16 %v114
    %v296 = vunpack.c.h.b16 %v114
    %v297 = vunpack.c.l.b16 %v115
    %v298 = vunpack.c.h.b16 %v115
    %v299 = vunpack.c.l.b16 %v116
    %v300 = vunpack.c.h.b16 %v116
    %v301 = vunpack.c.l.b16 %v117
    %v302 = vunpack.c.h.b16 %v117
    %v303 = vunpack.c.l.b16 %v118
    %v304 = vunpack.c.h.b16 %v118
    %v305 = vunpack.c.l.b16 %v119
    %v306 = vunpack.c.h.b16 %v119
    %v307 = vunpack.c.l.b16 %v120
    %v308 = vunpack.c.h.b16 %v120
    %v309 = vunpack.c.l.b16 %v121
    %v310 = vunpack.c.h.b16 %v121
    %v311 = vunpack.c.l.b16 %v122
    %v312 = vunpack.c.h.b16 %v122
    %v313 = vunpack.c.l.b16 %v123
    %v314 = vunpack.c.h.b16 %v123
    %v315 = vunpack.c.l.b16 %v124
    %v316 = vunpack.c.h.b16 %v124
    %v317 = vunpack.c.l.b16 %v125
    %v318 = vunpack.c.h.b16 %v125
    %v319 = vunpack.c.l.b16 %v126
    %v320 = vunpack.c.h.b16 %v126
    %v321 = vunpack.c.l.b16 %v127
    %v322 = vunpack.c.h.b16 %v127
    %v323 = vunpack.c.l.b16 %v128
    %v324 = vunpack.c.h.b16 %v128
    %v325 = vunpack.c.l.b16 %v129
    %v326 = vunpack.c.h.b16 %v129
    %v327 = vunpack.c.l.b16 %v130
    %v328 = vunpack.c.h.b16 %v130
    %v329 = vunpack.c.l.b16 %v131
    %v330 = vunpack.c.h.b16 %v131
    %v331 = vunpack.c.l.b16 %v132
    %v332 = vunpack.c.h.b16 %v132
    %v333 = vunpack.c.l.b16 %v133
    %v334 = vunpack.c.h.b16 %v133
    %v335 = vunpack.c.l.b16 %v134
    %v336 = vunpack.c.h.b16 %v134
    %v337 = vunpack.c.l.b16 %v135
    %v338 = vunpack.c.h.b16 %v135
    %v339 = vunpack.c.l.b16 %v136
    %v340 = vunpack.c.h.b16 %v136
    %v341 = vunpack.c.l.b16 %v137
    %v342 = vunpack.c.h.b16 %v137
    %v343 = vunpack.c.l.b16 %v138
    %v344 = vunpack.c.h.b16 %v138
    %v345 = vunpack.c.l.b16 %v139
    %v346 = vunpack.c.h.b16 %v139
    %v347 = vunpack.c.l.b16 %v140
    %v348 = vunpack.c.h.b16 %v140
    %v349 = vunpack.c.l.b16 %v141
    %v350 = vunpack.c.h.b16 %v141
    %v351 = vunpack.c.l.b16 %v142
    %v352 = vunpack.c.h.b16 %v142
    %v353 = vunpack.c.l.b16 %v143
    %v354 = vunpack.c.h.b16 %v143
    %v355 = vunpack.c.l.b16 %v144
    %v356 = vunpack.c.h.b16 %v144
    %v357 = vunpack.c.l.b16 %v145
    %v358 = vunpack.c.h.b16 %v145
    %v359 = vunpack.c.l.b16 %v146
    %v360 = vunpack.c.h.b16 %v146
    %v361 = vunpack.c.l.b16 %v147
    %v362 = vunpack.c.h.b16 %v147
    %v363 = vunpack.c.l.b16 %v148
    %v364 = vunpack.c.h.b16 %v148
    %v365 = vunpack.c.l.b16 %v149
    %v366 = vunpack.c.h.b16 %v149
    %v367 = vunpack.c.l.b16 %v150
    %v368 = vunpack.c.h.b16 %v150
    %v369 = vunpack.c.l.b16 %v151
    %v370 = vunpack.c.h.b16 %v151
    %v371 = vunpack.c.l.b16 %v152
    %v372 = vunpack.c.h.b16 %v152
    %v373 = vunpack.c.l.b16 %v153
    %v374 = vunpack.c.h.b16 %v153
    %v375 = vunpack.c.l.b16 %v154
    %v376 = vunpack.c.h.b16 %v154
    %v377 = vunpack.c.l.b16 %v155
    %v378 = vunpack.c.h.b16 %v155
    %v379 = vunpack.c.l.b16 %v156
    %v380 = vunpack.c.h.b16 %v156
    %v381 = vunpack.c.l.b16 %v157
    %v382 = vunpack.c.h.b16 %v157
    %v383 = vunpack.c.l.b16 %v158
    %v384 = vunpack.c.h.b16 %v158
    %v385 = vunpack.c.l.b16 %v159
    %v386 = vunpack.c.h.b16 %v159
    %v387 = vunpack.c.l.b16 %v160
    %v388 = vunpack.c.h.b16 %v160
    %v389 = vunpack.c.l.b16 %v161
    %v390 = vunpack.c.h.b16 %v161
    %v391 = vunpack.c.l.b16 %v162
    %v392 = vunpack.c.h.b16 %v162
    %v393 = vunpack.c.l.b16 %v163
    %v394 = vunpack.c.h.b16 %v163
    %v395 = vunpack.c.l.b16 %v164
    %v396 = vunpack.c.h.b16 %v164
    %v397 = vunpack.c.l.b16 %v165
    %v398 = vunpack.c.h.b16 %v165
    %v399 = vunpack.c.l.b16 %v166
    %v400 = vunpack.c.h.b16 %v166
    %v401 = vpack.c.b16 %v281, %v273
    %v402 = vpack.c.b16 %v282, %v274
    %v403 = vpack.c.b16 %v283, %v275
    %v404 = vpack.c.b16 %v284, %v276
    %v405 = vpack.c.b16 %v285, %v277
    %v406 = vpack.c.b16 %v286, %v278
    %v407 = vpack.c.b16 %v287, %v279
    %v408 = vpack.c.b16 %v288, %v280
    %v409 = vpack.c.b16 %v297, %v289
    %v410 = vpack.c.b16 %v298, %v290
    %v411 = vpack.c.b16 %v299, %v291
    %v412 = vpack.c.b16 %v300, %v292
    %v413 = vpack.c.b16 %v301, %v293
    %v414 = vpack.c.b16 %v302, %v294
    %v415 = vpack.c.b16 %v303, %v295
    %v416 = vpack.c.b16 %v304, %v296
    %v417 = vpack.c.b16 %v313, %v305
    %v418 = vpack.c.b16 %v314, %v306
    %v419 = vpack.c.b16 %v315, %v307
    %v420 = vpack.c.b16 %v316, %v308
    %v421 = vpack.c.b16 %v317, %v309
    %v422 = vpack.c.b16 %v318, %v310
    %v423 = vpack.c.b16 %v319, %v311
    %v424 = vpack.c.b16 %v320, %v312
    %v425 = vpack.c.b16 %v329, %v321
    %v426 = vpack.c.b16 %v330, %v322
    %v427 = vpack.c.b16 %v331, %v323
    %v428 = vpack.c.b16 %v332, %v324
    %v429 = vpack.c.b16 %v333, %v325
    %v430 = vpack.c.b16 %v334, %v326
    %v431 = vpack.c.b16 %v335, %v327
    %v432 = vpack.c.b16 %v336, %v328
    %v433 = vpack.c.b16 %v345, %v337
    %v434 = vpack.c.b16 %v346, %v338
    %v435 = vpack.c.b16 %v347, %v339
    %v436 = vpack.c.b16 %v348, %v340
    %v437 = vpack.c.b16 %v349, %v341
    %v438 = vpack.c.b16 %v350, %v342
    %v439 = vpack.c.b16 %v351, %v343
    %v440 = vpack.c.b16 %v352, %v344
    %v441 = vpack.c.b16 %v361, %v353
    %v442 = vpack.c.b16 %v362, %v354
    %v443 = vpack.c.b16 %v363, %v355
    %v444 = vpack.c.b16 %v364, %v356
    %v445 = vpack.c.b16 %v365, %v357
    %v446 = vpack.c.b16 %v366, %v358
    %v447 = vpack.c.b16 %v367, %v359
    %v448 = vpack.c.b16 %v368, %v360
    %v449 = vpack.c.b16 %v377, %v369
    %v450 = vpack.c.b16 %v378, %v370
    %v451 = vpack.c.b16 %v379, %v371
    %v452 = vpack.c.b16 %v380, %v372
    %v453 = vpack.c.b16 %v381, %v373
    %v454 = vpack.c.b16 %v382, %v374
    %v455 = vpack.c.b16 %v383, %v375
    %v456 = vpack.c.b16 %v384, %v376
    %v457 = vpack.c.b16 %v393, %v385
    %v458 = vpack.c.b16 %v394, %v386
    %v459 = vpack.c.b16 %v395, %v387
    %v460 = vpack.c.b16 %v396, %v388
    %v461 = vpack.c.b16 %v397, %v389
    %v462 = vpack.c.b16 %v398, %v390
    %v463 = vpack.c.b16 %v399, %v391
    %v464 = vpack.c.b16 %v400, %v392
    %529 = vmatprep.subr.bf16.mxu0 %v402
    %530 = vmatpush1.bf16.msra.mxu0 %v401
    %531 = vmatprep.subr.bf16.mxu0 %v410
    %532 = vmatpush1.bf16.msra.mxu0 %v409
    %533 = vmatprep.subr.bf16.mxu0 %v418
    %534 = vmatpush1.bf16.msra.mxu0 %v417
    %535 = vmatprep.subr.bf16.mxu0 %v426
    %536 = vmatpush1.bf16.msra.mxu0 %v425
    %537 = vmatprep.subr.bf16.mxu0 %v434
    %538 = vmatpush1.bf16.msra.mxu0 %v433
    %539 = vmatprep.subr.bf16.mxu0 %v442
    %540 = vmatpush1.bf16.msra.mxu0 %v441
    %541 = vmatprep.subr.bf16.mxu0 %v450
    %542 = vmatpush1.bf16.msra.mxu0 %v449
    %543 = vmatprep.subr.bf16.mxu0 %v458
    %544 = vmatpush1.bf16.msra.mxu0 %v457
    %545 = vmatprep.subr.bf16.mxu0 0
    %546 = vmatpush1.bf16.msra.mxu0 0
    %547 = vmatprep.subr.bf16.mxu0 0
    %548 = vmatpush1.bf16.msra.mxu0 0
    %549 = vmatprep.subr.bf16.mxu0 0
    %550 = vmatpush1.bf16.msra.mxu0 0
    %551 = vmatprep.subr.bf16.mxu0 0
    %552 = vmatpush1.bf16.msra.mxu0 0
    %553 = vmatprep.subr.bf16.mxu0 0
    %554 = vmatpush1.bf16.msra.mxu0 0
    %555 = vmatprep.subr.bf16.mxu0 0
    %556 = vmatpush1.bf16.msra.mxu0 0
    %557 = vmatprep.subr.bf16.mxu0 0
    %558 = vmatpush1.bf16.msra.mxu0 0
    %559 = vmatprep.subr.bf16.mxu0 0
    %560 = vmatpush1.bf16.msra.mxu0 0
    %561 = vmatprep.mubr.bf16.mxu0 0
    %562 = vmatmul.mubr.bf16.gmra.mrb[0].mxu0 %v102
    %v563 = vpop.f32.mrb[0].mxu0
    %v564 = vadd.f32 %v172, %v563
    %v565 = vpop.f32.mrb[0].mxu0
    %v566 = vadd.f32 %v176, %v565
    %v567 = vpop.f32.mrb[0].mxu0
    %v568 = vpop.f32.mrb[0].mxu0
    %569 = vdwg.mxu0
    %570 = vmatprep.subr.bf16.mxu0 %v404
    %571 = vmatpush1.bf16.msra.mxu0 %v403
    %572 = vmatprep.subr.bf16.mxu0 %v412
    %573 = vmatpush1.bf16.msra.mxu0 %v411
    %574 = vmatprep.subr.bf16.mxu0 %v420
    %575 = vmatpush1.bf16.msra.mxu0 %v419
    %576 = vmatprep.subr.bf16.mxu0 %v428
    %577 = vmatpush1.bf16.msra.mxu0 %v427
    %578 = vmatprep.subr.bf16.mxu0 %v436
    %579 = vmatpush1.bf16.msra.mxu0 %v435
    %580 = vmatprep.subr.bf16.mxu0 %v444
    %581 = vmatpush1.bf16.msra.mxu0 %v443
    %582 = vmatprep.subr.bf16.mxu0 %v452
    %583 = vmatpush1.bf16.msra.mxu0 %v451
    %584 = vmatprep.subr.bf16.mxu0 %v460
    %585 = vmatpush1.bf16.msra.mxu0 %v459
    %586 = vmatprep.subr.bf16.mxu0 0
    %587 = vmatpush1.bf16.msra.mxu0 0
    %588 = vmatprep.subr.bf16.mxu0 0
    %589 = vmatpush1.bf16.msra.mxu0 0
    %590 = vmatprep.subr.bf16.mxu0 0
    %591 = vmatpush1.bf16.msra.mxu0 0
    %592 = vmatprep.subr.bf16.mxu0 0
    %593 = vmatpush1.bf16.msra.mxu0 0
    %594 = vmatprep.subr.bf16.mxu0 0
    %595 = vmatpush1.bf16.msra.mxu0 0
    %596 = vmatprep.subr.bf16.mxu0 0
    %597 = vmatpush1.bf16.msra.mxu0 0
    %598 = vmatprep.subr.bf16.mxu0 0
    %599 = vmatpush1.bf16.msra.mxu0 0
    %600 = vmatprep.subr.bf16.mxu0 0
    %601 = vmatpush1.bf16.msra.mxu0 0
    %602 = vmatprep.mubr.bf16.mxu0 0
    %603 = vmatmul.mubr.bf16.gmra.mrb[0].mxu0 %v102
    %v604 = vpop.f32.mrb[0].mxu0
    %v605 = vadd.f32 %v180, %v604
    %v606 = vpop.f32.mrb[0].mxu0
    %v607 = vadd.f32 %v184, %v606
    %v608 = vpop.f32.mrb[0].mxu0
    %v609 = vpop.f32.mrb[0].mxu0
    %610 = vdwg.mxu0
    %611 = vmatprep.subr.bf16.mxu0 %v406
    %612 = vmatpush1.bf16.msra.mxu0 %v405
    %613 = vmatprep.subr.bf16.mxu0 %v414
    %614 = vmatpush1.bf16.msra.mxu0 %v413
    %615 = vmatprep.subr.bf16.mxu0 %v422
    %616 = vmatpush1.bf16.msra.mxu0 %v421
    %617 = vmatprep.subr.bf16.mxu0 %v430
    %618 = vmatpush1.bf16.msra.mxu0 %v429
    %619 = vmatprep.subr.bf16.mxu0 %v438
    %620 = vmatpush1.bf16.msra.mxu0 %v437
    %621 = vmatprep.subr.bf16.mxu0 %v446
    %622 = vmatpush1.bf16.msra.mxu0 %v445
    %623 = vmatprep.subr.bf16.mxu0 %v454
    %624 = vmatpush1.bf16.msra.mxu0 %v453
    %625 = vmatprep.subr.bf16.mxu0 %v462
    %626 = vmatpush1.bf16.msra.mxu0 %v461
    %627 = vmatprep.subr.bf16.mxu0 0
    %628 = vmatpush1.bf16.msra.mxu0 0
    %629 = vmatprep.subr.bf16.mxu0 0
    %630 = vmatpush1.bf16.msra.mxu0 0
    %631 = vmatprep.subr.bf16.mxu0 0
    %632 = vmatpush1.bf16.msra.mxu0 0
    %633 = vmatprep.subr.bf16.mxu0 0
    %634 = vmatpush1.bf16.msra.mxu0 0
    %635 = vmatprep.subr.bf16.mxu0 0
    %636 = vmatpush1.bf16.msra.mxu0 0
    %637 = vmatprep.subr.bf16.mxu0 0
    %638 = vmatpush1.bf16.msra.mxu0 0
    %639 = vmatprep.subr.bf16.mxu0 0
    %640 = vmatpush1.bf16.msra.mxu0 0
    %641 = vmatprep.subr.bf16.mxu0 0
    %642 = vmatpush1.bf16.msra.mxu0 0
    %643 = vmatprep.mubr.bf16.mxu0 0
    %644 = vmatmul.mubr.bf16.gmra.mrb[0].mxu0 %v102
    %v645 = vpop.f32.mrb[0].mxu0
    %v646 = vadd.f32 %v188, %v645
    %v647 = vpop.f32.mrb[0].mxu0
    %v648 = vadd.f32 %v192, %v647
    %v649 = vpop.f32.mrb[0].mxu0
    %v650 = vpop.f32.mrb[0].mxu0
    %651 = vdwg.mxu0
    %652 = vmatprep.subr.bf16.mxu0 %v408
    %653 = vmatpush1.bf16.msra.mxu0 %v407
    %654 = vmatprep.subr.bf16.mxu0 %v416
    %655 = vmatpush1.bf16.msra.mxu0 %v415
    %656 = vmatprep.subr.bf16.mxu0 %v424
    %657 = vmatpush1.bf16.msra.mxu0 %v423
    %658 = vmatprep.subr.bf16.mxu0 %v432
    %659 = vmatpush1.bf16.msra.mxu0 %v431
    %660 = vmatprep.subr.bf16.mxu0 %v440
    %661 = vmatpush1.bf16.msra.mxu0 %v439
    %662 = vmatprep.subr.bf16.mxu0 %v448
    %663 = vmatpush1.bf16.msra.mxu0 %v447
    %664 = vmatprep.subr.bf16.mxu0 %v456
    %665 = vmatpush1.bf16.msra.mxu0 %v455
    %666 = vmatprep.subr.bf16.mxu0 %v464
    %667 = vmatpush1.bf16.msra.mxu0 %v463
    %668 = vmatprep.subr.bf16.mxu0 0
    %669 = vmatpush1.bf16.msra.mxu0 0
    %670 = vmatprep.subr.bf16.mxu0 0
    %671 = vmatpush1.bf16.msra.mxu0 0
    %672 = vmatprep.subr.bf16.mxu0 0
    %673 = vmatpush1.bf16.msra.mxu0 0
    %674 = vmatprep.subr.bf16.mxu0 0
    %675 = vmatpush1.bf16.msra.mxu0 0
    %676 = vmatprep.subr.bf16.mxu0 0
    %677 = vmatpush1.bf16.msra.mxu0 0
    %678 = vmatprep.subr.bf16.mxu0 0
    %679 = vmatpush1.bf16.msra.mxu0 0
    %680 = vmatprep.subr.bf16.mxu0 0
    %681 = vmatpush1.bf16.msra.mxu0 0
    %682 = vmatprep.subr.bf16.mxu0 0
    %683 = vmatpush1.bf16.msra.mxu0 0
    %684 = vmatprep.mubr.bf16.mxu0 0
    %685 = vmatmul.mubr.bf16.gmra.mrb[0].mxu0 %v102
    %v686 = vpop.f32.mrb[0].mxu0
    %v687 = vadd.f32 %v196, %v686
    %v688 = vpop.f32.mrb[0].mxu0
    %v689 = vadd.f32 %v200, %v688
    %v690 = vpop.f32.mrb[0].mxu0
    %v691 = vpop.f32.mrb[0].mxu0
    %692 = vdwg.mxu0
    %vm693 = vcmp.gt.f32.partialorder %v564, 0.0
    %vm694 = vcmp.gt.f32.partialorder %v566, 0.0
    %vm695 = vcmp.gt.f32.partialorder %v605, 0.0
    %vm696 = vcmp.gt.f32.partialorder %v607, 0.0
    %vm697 = vcmp.gt.f32.partialorder %v646, 0.0
    %vm698 = vcmp.gt.f32.partialorder %v648, 0.0
    %vm699 = vcmp.gt.f32.partialorder %v687, 0.0
    %vm700 = vcmp.gt.f32.partialorder %v689, 0.0
    %v701 = vmul.f32 %v564, 0.2
    %v702 = vmul.f32 %v566, 0.2
    %v703 = vmul.f32 %v605, 0.2
    %v704 = vmul.f32 %v607, 0.2
    %v705 = vmul.f32 %v646, 0.2
    %v706 = vmul.f32 %v648, 0.2
    %v707 = vmul.f32 %v687, 0.2
    %v708 = vmul.f32 %v689, 0.2
    %v709 = vsel %vm693, %v564, %v701
    %v710 = vsel %vm694, %v566, %v702
    %v711 = vsel %vm695, %v605, %v703
    %v712 = vsel %vm696, %v607, %v704
    %v713 = vsel %vm697, %v646, %v705
    %v714 = vsel %vm698, %v648, %v706
    %v715 = vsel %vm699, %v687, %v707
    %v716 = vsel %vm700, %v689, %v708
    %v717 = vpack.c.bf16 %v709, %v709
    %v718 = vpack.c.bf16 %v710, %v710
    %v719 = vpack.c.bf16 %v711, %v711
    %v720 = vpack.c.bf16 %v712, %v712
    %v721 = vpack.c.bf16 %v713, %v713
    %v722 = vpack.c.bf16 %v714, %v714
    %v723 = vpack.c.bf16 %v715, %v715
    %v724 = vpack.c.bf16 %v716, %v716
    %v725 = vld [vmem:[#allocation5] sm:$0xff]
    %v726 = vld [vmem:[#allocation5 + $0x8] sm:$0xff]
    %v727 = vld [vmem:[#allocation5 + $0x10] sm:$0xff]
    %v728 = vld [vmem:[#allocation5 + $0x18] sm:$0xff]
    %v729 = vld [vmem:[#allocation5 + $0x20] sm:$0xff]
    %v730 = vld [vmem:[#allocation5 + $0x28] sm:$0xff]
    %v731 = vld [vmem:[#allocation5 + $0x30] sm:$0xff]
    %v732 = vld [vmem:[#allocation5 + $0x38] sm:$0xff]
    %v733 = vld [vmem:[#allocation5 + $0x40] sm:$0xff]
    %v734 = vld [vmem:[#allocation5 + $0x48] sm:$0xff]
    %v735 = vld [vmem:[#allocation5 + $0x50] sm:$0xff]
    %v736 = vld [vmem:[#allocation5 + $0x58] sm:$0xff]
    %v737 = vld [vmem:[#allocation5 + $0x60] sm:$0xff]
    %v738 = vld [vmem:[#allocation5 + $0x68] sm:$0xff]
    %v739 = vld [vmem:[#allocation5 + $0x70] sm:$0xff]
    %v740 = vld [vmem:[#allocation5 + $0x78] sm:$0xff]
    %v741 = vld [vmem:[#allocation5 + $0x80] sm:$0xff]
    %v742 = vld [vmem:[#allocation5 + $0x88] sm:$0xff]
    %v743 = vld [vmem:[#allocation5 + $0x90] sm:$0xff]
    %v744 = vld [vmem:[#allocation5 + $0x98] sm:$0xff]
    %v745 = vld [vmem:[#allocation5 + $0xa0] sm:$0xff]
    %v746 = vld [vmem:[#allocation5 + $0xa8] sm:$0xff]
    %v747 = vld [vmem:[#allocation5 + $0xb0] sm:$0xff]
    %v748 = vld [vmem:[#allocation5 + $0xb8] sm:$0xff]
    %v749 = vld [vmem:[#allocation5 + $0xc0] sm:$0xff]
    %v750 = vld [vmem:[#allocation5 + $0xc8] sm:$0xff]
    %v751 = vld [vmem:[#allocation5 + $0xd0] sm:$0xff]
    %v752 = vld [vmem:[#allocation5 + $0xd8] sm:$0xff]
    %v753 = vld [vmem:[#allocation5 + $0xe0] sm:$0xff]
    %v754 = vld [vmem:[#allocation5 + $0xe8] sm:$0xff]
    %v755 = vld [vmem:[#allocation5 + $0xf0] sm:$0xff]
    %v756 = vld [vmem:[#allocation5 + $0xf8] sm:$0xff]
    %v757 = vld [vmem:[#allocation5 + $0x100] sm:$0xff]
    %v758 = vld [vmem:[#allocation5 + $0x108] sm:$0xff]
    %v759 = vld [vmem:[#allocation5 + $0x110] sm:$0xff]
    %v760 = vld [vmem:[#allocation5 + $0x118] sm:$0xff]
    %v761 = vld [vmem:[#allocation5 + $0x120] sm:$0xff]
    %v762 = vld [vmem:[#allocation5 + $0x128] sm:$0xff]
    %v763 = vld [vmem:[#allocation5 + $0x130] sm:$0xff]
    %v764 = vld [vmem:[#allocation5 + $0x138] sm:$0xff]
    %v765 = vld [vmem:[#allocation5 + $0x140] sm:$0xff]
    %v766 = vld [vmem:[#allocation5 + $0x148] sm:$0xff]
    %v767 = vld [vmem:[#allocation5 + $0x150] sm:$0xff]
    %v768 = vld [vmem:[#allocation5 + $0x158] sm:$0xff]
    %v769 = vld [vmem:[#allocation5 + $0x160] sm:$0xff]
    %v770 = vld [vmem:[#allocation5 + $0x168] sm:$0xff]
    %v771 = vld [vmem:[#allocation5 + $0x170] sm:$0xff]
    %v772 = vld [vmem:[#allocation5 + $0x178] sm:$0xff]
    %v773 = vld [vmem:[#allocation5 + $0x180] sm:$0xff]
    %v774 = vld [vmem:[#allocation5 + $0x188] sm:$0xff]
    %v775 = vld [vmem:[#allocation5 + $0x190] sm:$0xff]
    %v776 = vld [vmem:[#allocation5 + $0x198] sm:$0xff]
    %v777 = vld [vmem:[#allocation5 + $0x1a0] sm:$0xff]
    %v778 = vld [vmem:[#allocation5 + $0x1a8] sm:$0xff]
    %v779 = vld [vmem:[#allocation5 + $0x1b0] sm:$0xff]
    %v780 = vld [vmem:[#allocation5 + $0x1b8] sm:$0xff]
    %v781 = vld [vmem:[#allocation5 + $0x1c0] sm:$0xff]
    %v782 = vld [vmem:[#allocation5 + $0x1c8] sm:$0xff]
    %v783 = vld [vmem:[#allocation5 + $0x1d0] sm:$0xff]
    %v784 = vld [vmem:[#allocation5 + $0x1d8] sm:$0xff]
    %v785 = vld [vmem:[#allocation5 + $0x1e0] sm:$0xff]
    %v786 = vld [vmem:[#allocation5 + $0x1e8] sm:$0xff]
    %v787 = vld [vmem:[#allocation5 + $0x1f0] sm:$0xff]
    %v788 = vld [vmem:[#allocation5 + $0x1f8] sm:$0xff]
    %v789 = vld [vmem:[#allocation5 + $0x200] sm:$0xff]
    %v790 = vld [vmem:[#allocation5 + $0x208] sm:$0xff]
    %v791 = vld [vmem:[#allocation5 + $0x210] sm:$0xff]
    %v792 = vld [vmem:[#allocation5 + $0x218] sm:$0xff]
    %v793 = vld [vmem:[#allocation5 + $0x220] sm:$0xff]
    %v794 = vld [vmem:[#allocation5 + $0x228] sm:$0xff]
    %v795 = vld [vmem:[#allocation5 + $0x230] sm:$0xff]
    %v796 = vld [vmem:[#allocation5 + $0x238] sm:$0xff]
    %v797 = vld [vmem:[#allocation5 + $0x240] sm:$0xff]
    %v798 = vld [vmem:[#allocation5 + $0x248] sm:$0xff]
    %v799 = vld [vmem:[#allocation5 + $0x250] sm:$0xff]
    %v800 = vld [vmem:[#allocation5 + $0x258] sm:$0xff]
    %v801 = vld [vmem:[#allocation5 + $0x260] sm:$0xff]
    %v802 = vld [vmem:[#allocation5 + $0x268] sm:$0xff]
    %v803 = vld [vmem:[#allocation5 + $0x270] sm:$0xff]
    %v804 = vld [vmem:[#allocation5 + $0x278] sm:$0xff]
    %v805 = vld [vmem:[#allocation5 + $0x280] sm:$0xff]
    %v806 = vld [vmem:[#allocation5 + $0x288] sm:$0xff]
    %v807 = vld [vmem:[#allocation5 + $0x290] sm:$0xff]
    %v808 = vld [vmem:[#allocation5 + $0x298] sm:$0xff]
    %v809 = vld [vmem:[#allocation5 + $0x2a0] sm:$0xff]
    %v810 = vld [vmem:[#allocation5 + $0x2a8] sm:$0xff]
    %v811 = vld [vmem:[#allocation5 + $0x2b0] sm:$0xff]
    %v812 = vld [vmem:[#allocation5 + $0x2b8] sm:$0xff]
    %v813 = vld [vmem:[#allocation5 + $0x2c0] sm:$0xff]
    %v814 = vld [vmem:[#allocation5 + $0x2c8] sm:$0xff]
    %v815 = vld [vmem:[#allocation5 + $0x2d0] sm:$0xff]
    %v816 = vld [vmem:[#allocation5 + $0x2d8] sm:$0xff]
    %v817 = vld [vmem:[#allocation5 + $0x2e0] sm:$0xff]
    %v818 = vld [vmem:[#allocation5 + $0x2e8] sm:$0xff]
    %v819 = vld [vmem:[#allocation5 + $0x2f0] sm:$0xff]
    %v820 = vld [vmem:[#allocation5 + $0x2f8] sm:$0xff]
    %v821 = vld [vmem:[#allocation5 + $0x300] sm:$0xff]
    %v822 = vld [vmem:[#allocation5 + $0x308] sm:$0xff]
    %v823 = vld [vmem:[#allocation5 + $0x310] sm:$0xff]
    %v824 = vld [vmem:[#allocation5 + $0x318] sm:$0xff]
    %v825 = vld [vmem:[#allocation5 + $0x320] sm:$0xff]
    %v826 = vld [vmem:[#allocation5 + $0x328] sm:$0xff]
    %v827 = vld [vmem:[#allocation5 + $0x330] sm:$0xff]
    %v828 = vld [vmem:[#allocation5 + $0x338] sm:$0xff]
    %v829 = vld [vmem:[#allocation5 + $0x340] sm:$0xff]
    %v830 = vld [vmem:[#allocation5 + $0x348] sm:$0xff]
    %v831 = vld [vmem:[#allocation5 + $0x350] sm:$0xff]
    %v832 = vld [vmem:[#allocation5 + $0x358] sm:$0xff]
    %v833 = vld [vmem:[#allocation5 + $0x360] sm:$0xff]
    %v834 = vld [vmem:[#allocation5 + $0x368] sm:$0xff]
    %v835 = vld [vmem:[#allocation5 + $0x370] sm:$0xff]
    %v836 = vld [vmem:[#allocation5 + $0x378] sm:$0xff]
    %v837 = vld [vmem:[#allocation5 + $0x380] sm:$0xff]
    %v838 = vld [vmem:[#allocation5 + $0x388] sm:$0xff]
    %v839 = vld [vmem:[#allocation5 + $0x390] sm:$0xff]
    %v840 = vld [vmem:[#allocation5 + $0x398] sm:$0xff]
    %v841 = vld [vmem:[#allocation5 + $0x3a0] sm:$0xff]
    %v842 = vld [vmem:[#allocation5 + $0x3a8] sm:$0xff]
    %v843 = vld [vmem:[#allocation5 + $0x3b0] sm:$0xff]
    %v844 = vld [vmem:[#allocation5 + $0x3b8] sm:$0xff]
    %v845 = vld [vmem:[#allocation5 + $0x3c0] sm:$0xff]
    %v846 = vld [vmem:[#allocation5 + $0x3c8] sm:$0xff]
    %v847 = vld [vmem:[#allocation5 + $0x3d0] sm:$0xff]
    %v848 = vld [vmem:[#allocation5 + $0x3d8] sm:$0xff]
    %v849 = vld [vmem:[#allocation5 + $0x3e0] sm:$0xff]
    %v850 = vld [vmem:[#allocation5 + $0x3e8] sm:$0xff]
    %v851 = vld [vmem:[#allocation5 + $0x3f0] sm:$0xff]
    %v852 = vld [vmem:[#allocation5 + $0x3f8] sm:$0xff]
    %v853 = vld [vmem:[#allocation5 + $0x400] sm:$0xff]
    %v854 = vld [vmem:[#allocation5 + $0x408] sm:$0xff]
    %v855 = vld [vmem:[#allocation5 + $0x410] sm:$0xff]
    %v856 = vld [vmem:[#allocation5 + $0x418] sm:$0xff]
    %v857 = vld [vmem:[#allocation5 + $0x420] sm:$0xff]
    %v858 = vld [vmem:[#allocation5 + $0x428] sm:$0xff]
    %v859 = vld [vmem:[#allocation5 + $0x430] sm:$0xff]
    %v860 = vld [vmem:[#allocation5 + $0x438] sm:$0xff]
    %v861 = vld [vmem:[#allocation5 + $0x440] sm:$0xff]
    %v862 = vld [vmem:[#allocation5 + $0x448] sm:$0xff]
    %v863 = vld [vmem:[#allocation5 + $0x450] sm:$0xff]
    %v864 = vld [vmem:[#allocation5 + $0x458] sm:$0xff]
    %v865 = vld [vmem:[#allocation5 + $0x460] sm:$0xff]
    %v866 = vld [vmem:[#allocation5 + $0x468] sm:$0xff]
    %v867 = vld [vmem:[#allocation5 + $0x470] sm:$0xff]
    %v868 = vld [vmem:[#allocation5 + $0x478] sm:$0xff]
    %v869 = vld [vmem:[#allocation5 + $0x480] sm:$0xff]
    %v870 = vld [vmem:[#allocation5 + $0x488] sm:$0xff]
    %v871 = vld [vmem:[#allocation5 + $0x490] sm:$0xff]
    %v872 = vld [vmem:[#allocation5 + $0x498] sm:$0xff]
    %v873 = vld [vmem:[#allocation5 + $0x4a0] sm:$0xff]
    %v874 = vld [vmem:[#allocation5 + $0x4a8] sm:$0xff]
    %v875 = vld [vmem:[#allocation5 + $0x4b0] sm:$0xff]
    %v876 = vld [vmem:[#allocation5 + $0x4b8] sm:$0xff]
    %v877 = vld [vmem:[#allocation5 + $0x4c0] sm:$0xff]
    %v878 = vld [vmem:[#allocation5 + $0x4c8] sm:$0xff]
    %v879 = vld [vmem:[#allocation5 + $0x4d0] sm:$0xff]
    %v880 = vld [vmem:[#allocation5 + $0x4d8] sm:$0xff]
    %v881 = vld [vmem:[#allocation5 + $0x4e0] sm:$0xff]
    %v882 = vld [vmem:[#allocation5 + $0x4e8] sm:$0xff]
    %v883 = vld [vmem:[#allocation5 + $0x4f0] sm:$0xff]
    %v884 = vld [vmem:[#allocation5 + $0x4f8] sm:$0xff]
    %v885 = vld [vmem:[#allocation5 + $0x500] sm:$0xff]
    %v886 = vld [vmem:[#allocation5 + $0x508] sm:$0xff]
    %v887 = vld [vmem:[#allocation5 + $0x510] sm:$0xff]
    %v888 = vld [vmem:[#allocation5 + $0x518] sm:$0xff]
    %v889 = vld [vmem:[#allocation5 + $0x520] sm:$0xff]
    %v890 = vld [vmem:[#allocation5 + $0x528] sm:$0xff]
    %v891 = vld [vmem:[#allocation5 + $0x530] sm:$0xff]
    %v892 = vld [vmem:[#allocation5 + $0x538] sm:$0xff]
    %v893 = vld [vmem:[#allocation5 + $0x540] sm:$0xff]
    %v894 = vld [vmem:[#allocation5 + $0x548] sm:$0xff]
    %v895 = vld [vmem:[#allocation5 + $0x550] sm:$0xff]
    %v896 = vld [vmem:[#allocation5 + $0x558] sm:$0xff]
    %v897 = vld [vmem:[#allocation5 + $0x560] sm:$0xff]
    %v898 = vld [vmem:[#allocation5 + $0x568] sm:$0xff]
    %v899 = vld [vmem:[#allocation5 + $0x570] sm:$0xff]
    %v900 = vld [vmem:[#allocation5 + $0x578] sm:$0xff]
    %v901 = vld [vmem:[#allocation5 + $0x580] sm:$0xff]
    %v902 = vld [vmem:[#allocation5 + $0x588] sm:$0xff]
    %v903 = vld [vmem:[#allocation5 + $0x590] sm:$0xff]
    %v904 = vld [vmem:[#allocation5 + $0x598] sm:$0xff]
    %v905 = vld [vmem:[#allocation5 + $0x5a0] sm:$0xff]
    %v906 = vld [vmem:[#allocation5 + $0x5a8] sm:$0xff]
    %v907 = vld [vmem:[#allocation5 + $0x5b0] sm:$0xff]
    %v908 = vld [vmem:[#allocation5 + $0x5b8] sm:$0xff]
    %v909 = vld [vmem:[#allocation5 + $0x5c0] sm:$0xff]
    %v910 = vld [vmem:[#allocation5 + $0x5c8] sm:$0xff]
    %v911 = vld [vmem:[#allocation5 + $0x5d0] sm:$0xff]
    %v912 = vld [vmem:[#allocation5 + $0x5d8] sm:$0xff]
    %v913 = vld [vmem:[#allocation5 + $0x5e0] sm:$0xff]
    %v914 = vld [vmem:[#allocation5 + $0x5e8] sm:$0xff]
    %v915 = vld [vmem:[#allocation5 + $0x5f0] sm:$0xff]
    %v916 = vld [vmem:[#allocation5 + $0x5f8] sm:$0xff]
    %v917 = vld [vmem:[#allocation5 + $0x600] sm:$0xff]
    %v918 = vld [vmem:[#allocation5 + $0x608] sm:$0xff]
    %v919 = vld [vmem:[#allocation5 + $0x610] sm:$0xff]
    %v920 = vld [vmem:[#allocation5 + $0x618] sm:$0xff]
    %v921 = vld [vmem:[#allocation5 + $0x620] sm:$0xff]
    %v922 = vld [vmem:[#allocation5 + $0x628] sm:$0xff]
    %v923 = vld [vmem:[#allocation5 + $0x630] sm:$0xff]
    %v924 = vld [vmem:[#allocation5 + $0x638] sm:$0xff]
    %v925 = vld [vmem:[#allocation5 + $0x640] sm:$0xff]
    %v926 = vld [vmem:[#allocation5 + $0x648] sm:$0xff]
    %v927 = vld [vmem:[#allocation5 + $0x650] sm:$0xff]
    %v928 = vld [vmem:[#allocation5 + $0x658] sm:$0xff]
    %v929 = vld [vmem:[#allocation5 + $0x660] sm:$0xff]
    %v930 = vld [vmem:[#allocation5 + $0x668] sm:$0xff]
    %v931 = vld [vmem:[#allocation5 + $0x670] sm:$0xff]
    %v932 = vld [vmem:[#allocation5 + $0x678] sm:$0xff]
    %v933 = vld [vmem:[#allocation5 + $0x680] sm:$0xff]
    %v934 = vld [vmem:[#allocation5 + $0x688] sm:$0xff]
    %v935 = vld [vmem:[#allocation5 + $0x690] sm:$0xff]
    %v936 = vld [vmem:[#allocation5 + $0x698] sm:$0xff]
    %v937 = vld [vmem:[#allocation5 + $0x6a0] sm:$0xff]
    %v938 = vld [vmem:[#allocation5 + $0x6a8] sm:$0xff]
    %v939 = vld [vmem:[#allocation5 + $0x6b0] sm:$0xff]
    %v940 = vld [vmem:[#allocation5 + $0x6b8] sm:$0xff]
    %v941 = vld [vmem:[#allocation5 + $0x6c0] sm:$0xff]
    %v942 = vld [vmem:[#allocation5 + $0x6c8] sm:$0xff]
    %v943 = vld [vmem:[#allocation5 + $0x6d0] sm:$0xff]
    %v944 = vld [vmem:[#allocation5 + $0x6d8] sm:$0xff]
    %v945 = vld [vmem:[#allocation5 + $0x6e0] sm:$0xff]
    %v946 = vld [vmem:[#allocation5 + $0x6e8] sm:$0xff]
    %v947 = vld [vmem:[#allocation5 + $0x6f0] sm:$0xff]
    %v948 = vld [vmem:[#allocation5 + $0x6f8] sm:$0xff]
    %v949 = vld [vmem:[#allocation5 + $0x700] sm:$0xff]
    %v950 = vld [vmem:[#allocation5 + $0x708] sm:$0xff]
    %v951 = vld [vmem:[#allocation5 + $0x710] sm:$0xff]
    %v952 = vld [vmem:[#allocation5 + $0x718] sm:$0xff]
    %v953 = vld [vmem:[#allocation5 + $0x720] sm:$0xff]
    %v954 = vld [vmem:[#allocation5 + $0x728] sm:$0xff]
    %v955 = vld [vmem:[#allocation5 + $0x730] sm:$0xff]
    %v956 = vld [vmem:[#allocation5 + $0x738] sm:$0xff]
    %v957 = vld [vmem:[#allocation5 + $0x740] sm:$0xff]
    %v958 = vld [vmem:[#allocation5 + $0x748] sm:$0xff]
    %v959 = vld [vmem:[#allocation5 + $0x750] sm:$0xff]
    %v960 = vld [vmem:[#allocation5 + $0x758] sm:$0xff]
    %v961 = vld [vmem:[#allocation5 + $0x760] sm:$0xff]
    %v962 = vld [vmem:[#allocation5 + $0x768] sm:$0xff]
    %v963 = vld [vmem:[#allocation5 + $0x770] sm:$0xff]
    %v964 = vld [vmem:[#allocation5 + $0x778] sm:$0xff]
    %v965 = vld [vmem:[#allocation5 + $0x780] sm:$0xff]
    %v966 = vld [vmem:[#allocation5 + $0x788] sm:$0xff]
    %v967 = vld [vmem:[#allocation5 + $0x790] sm:$0xff]
    %v968 = vld [vmem:[#allocation5 + $0x798] sm:$0xff]
    %v969 = vld [vmem:[#allocation5 + $0x7a0] sm:$0xff]
    %v970 = vld [vmem:[#allocation5 + $0x7a8] sm:$0xff]
    %v971 = vld [vmem:[#allocation5 + $0x7b0] sm:$0xff]
    %v972 = vld [vmem:[#allocation5 + $0x7b8] sm:$0xff]
    %v973 = vld [vmem:[#allocation5 + $0x7c0] sm:$0xff]
    %v974 = vld [vmem:[#allocation5 + $0x7c8] sm:$0xff]
    %v975 = vld [vmem:[#allocation5 + $0x7d0] sm:$0xff]
    %v976 = vld [vmem:[#allocation5 + $0x7d8] sm:$0xff]
    %v977 = vld [vmem:[#allocation5 + $0x7e0] sm:$0xff]
    %v978 = vld [vmem:[#allocation5 + $0x7e8] sm:$0xff]
    %v979 = vld [vmem:[#allocation5 + $0x7f0] sm:$0xff]
    %v980 = vld [vmem:[#allocation5 + $0x7f8] sm:$0xff]
    %v981 = vld [vmem:[%s4] sm:$0xf]
    %v983 = vlaneseq
    %v984 = vshrl.u32 %v983, 7
    %v985 = vsub.s32 0, %v984
    %v986 = vrot.slane %v981, %v985
    %v987 = vlaneseq
    %v988 = vshrl.u32 %v987, 7
    %v989 = vsub.s32 1, %v988
    %v990 = vrot.slane %v981, %v989
    %v991 = vlaneseq
    %v992 = vshrl.u32 %v991, 7
    %v993 = vsub.s32 2, %v992
    %v994 = vrot.slane %v981, %v993
    %v995 = vlaneseq
    %v996 = vshrl.u32 %v995, 7
    %v997 = vsub.s32 3, %v996
    %v998 = vrot.slane %v981, %v997
    %v1259 = vunpack.c.l.b16 %v725
    %v1260 = vunpack.c.h.b16 %v725
    %v1261 = vunpack.c.l.b16 %v726
    %v1262 = vunpack.c.h.b16 %v726
    %v1263 = vunpack.c.l.b16 %v727
    %v1264 = vunpack.c.h.b16 %v727
    %v1265 = vunpack.c.l.b16 %v728
    %v1266 = vunpack.c.h.b16 %v728
    %v1267 = vunpack.c.l.b16 %v729
    %v1268 = vunpack.c.h.b16 %v729
    %v1269 = vunpack.c.l.b16 %v730
    %v1270 = vunpack.c.h.b16 %v730
    %v1271 = vunpack.c.l.b16 %v731
    %v1272 = vunpack.c.h.b16 %v731
    %v1273 = vunpack.c.l.b16 %v732
    %v1274 = vunpack.c.h.b16 %v732
    %v1275 = vunpack.c.l.b16 %v733
    %v1276 = vunpack.c.h.b16 %v733
    %v1277 = vunpack.c.l.b16 %v734
    %v1278 = vunpack.c.h.b16 %v734
    %v1279 = vunpack.c.l.b16 %v735
    %v1280 = vunpack.c.h.b16 %v735
    %v1281 = vunpack.c.l.b16 %v736
    %v1282 = vunpack.c.h.b16 %v736
    %v1283 = vunpack.c.l.b16 %v737
    %v1284 = vunpack.c.h.b16 %v737
    %v1285 = vunpack.c.l.b16 %v738
    %v1286 = vunpack.c.h.b16 %v738
    %v1287 = vunpack.c.l.b16 %v739
    %v1288 = vunpack.c.h.b16 %v739
    %v1289 = vunpack.c.l.b16 %v740
    %v1290 = vunpack.c.h.b16 %v740
    %v1291 = vunpack.c.l.b16 %v741
    %v1292 = vunpack.c.h.b16 %v741
    %v1293 = vunpack.c.l.b16 %v742
    %v1294 = vunpack.c.h.b16 %v742
    %v1295 = vunpack.c.l.b16 %v743
    %v1296 = vunpack.c.h.b16 %v743
    %v1297 = vunpack.c.l.b16 %v744
    %v1298 = vunpack.c.h.b16 %v744
    %v1299 = vunpack.c.l.b16 %v745
    %v1300 = vunpack.c.h.b16 %v745
    %v1301 = vunpack.c.l.b16 %v746
    %v1302 = vunpack.c.h.b16 %v746
    %v1303 = vunpack.c.l.b16 %v747
    %v1304 = vunpack.c.h.b16 %v747
    %v1305 = vunpack.c.l.b16 %v748
    %v1306 = vunpack.c.h.b16 %v748
    %v1307 = vunpack.c.l.b16 %v749
    %v1308 = vunpack.c.h.b16 %v749
    %v1309 = vunpack.c.l.b16 %v750
    %v1310 = vunpack.c.h.b16 %v750
    %v1311 = vunpack.c.l.b16 %v751
    %v1312 = vunpack.c.h.b16 %v751
    %v1313 = vunpack.c.l.b16 %v752
    %v1314 = vunpack.c.h.b16 %v752
    %v1315 = vunpack.c.l.b16 %v753
    %v1316 = vunpack.c.h.b16 %v753
    %v1317 = vunpack.c.l.b16 %v754
    %v1318 = vunpack.c.h.b16 %v754
    %v1319 = vunpack.c.l.b16 %v755
    %v1320 = vunpack.c.h.b16 %v755
    %v1321 = vunpack.c.l.b16 %v756
    %v1322 = vunpack.c.h.b16 %v756
    %v1323 = vunpack.c.l.b16 %v757
    %v1324 = vunpack.c.h.b16 %v757
    %v1325 = vunpack.c.l.b16 %v758
    %v1326 = vunpack.c.h.b16 %v758
    %v1327 = vunpack.c.l.b16 %v759
    %v1328 = vunpack.c.h.b16 %v759
    %v1329 = vunpack.c.l.b16 %v760
    %v1330 = vunpack.c.h.b16 %v760
    %v1331 = vunpack.c.l.b16 %v761
    %v1332 = vunpack.c.h.b16 %v761
    %v1333 = vunpack.c.l.b16 %v762
    %v1334 = vunpack.c.h.b16 %v762
    %v1335 = vunpack.c.l.b16 %v763
    %v1336 = vunpack.c.h.b16 %v763
    %v1337 = vunpack.c.l.b16 %v764
    %v1338 = vunpack.c.h.b16 %v764
    %v1339 = vunpack.c.l.b16 %v765
    %v1340 = vunpack.c.h.b16 %v765
    %v1341 = vunpack.c.l.b16 %v766
    %v1342 = vunpack.c.h.b16 %v766
    %v1343 = vunpack.c.l.b16 %v767
    %v1344 = vunpack.c.h.b16 %v767
    %v1345 = vunpack.c.l.b16 %v768
    %v1346 = vunpack.c.h.b16 %v768
    %v1347 = vunpack.c.l.b16 %v769
    %v1348 = vunpack.c.h.b16 %v769
    %v1349 = vunpack.c.l.b16 %v770
    %v1350 = vunpack.c.h.b16 %v770
    %v1351 = vunpack.c.l.b16 %v771
    %v1352 = vunpack.c.h.b16 %v771
    %v1353 = vunpack.c.l.b16 %v772
    %v1354 = vunpack.c.h.b16 %v772
    %v1355 = vunpack.c.l.b16 %v773
    %v1356 = vunpack.c.h.b16 %v773
    %v1357 = vunpack.c.l.b16 %v774
    %v1358 = vunpack.c.h.b16 %v774
    %v1359 = vunpack.c.l.b16 %v775
    %v1360 = vunpack.c.h.b16 %v775
    %v1361 = vunpack.c.l.b16 %v776
    %v1362 = vunpack.c.h.b16 %v776
    %v1363 = vunpack.c.l.b16 %v777
    %v1364 = vunpack.c.h.b16 %v777
    %v1365 = vunpack.c.l.b16 %v778
    %v1366 = vunpack.c.h.b16 %v778
    %v1367 = vunpack.c.l.b16 %v779
    %v1368 = vunpack.c.h.b16 %v779
    %v1369 = vunpack.c.l.b16 %v780
    %v1370 = vunpack.c.h.b16 %v780
    %v1371 = vunpack.c.l.b16 %v781
    %v1372 = vunpack.c.h.b16 %v781
    %v1373 = vunpack.c.l.b16 %v782
    %v1374 = vunpack.c.h.b16 %v782
    %v1375 = vunpack.c.l.b16 %v783
    %v1376 = vunpack.c.h.b16 %v783
    %v1377 = vunpack.c.l.b16 %v784
    %v1378 = vunpack.c.h.b16 %v784
    %v1379 = vunpack.c.l.b16 %v785
    %v1380 = vunpack.c.h.b16 %v785
    %v1381 = vunpack.c.l.b16 %v786
    %v1382 = vunpack.c.h.b16 %v786
    %v1383 = vunpack.c.l.b16 %v787
    %v1384 = vunpack.c.h.b16 %v787
    %v1385 = vunpack.c.l.b16 %v788
    %v1386 = vunpack.c.h.b16 %v788
    %v1387 = vunpack.c.l.b16 %v789
    %v1388 = vunpack.c.h.b16 %v789
    %v1389 = vunpack.c.l.b16 %v790
    %v1390 = vunpack.c.h.b16 %v790
    %v1391 = vunpack.c.l.b16 %v791
    %v1392 = vunpack.c.h.b16 %v791
    %v1393 = vunpack.c.l.b16 %v792
    %v1394 = vunpack.c.h.b16 %v792
    %v1395 = vunpack.c.l.b16 %v793
    %v1396 = vunpack.c.h.b16 %v793
    %v1397 = vunpack.c.l.b16 %v794
    %v1398 = vunpack.c.h.b16 %v794
    %v1399 = vunpack.c.l.b16 %v795
    %v1400 = vunpack.c.h.b16 %v795
    %v1401 = vunpack.c.l.b16 %v796
    %v1402 = vunpack.c.h.b16 %v796
    %v1403 = vunpack.c.l.b16 %v797
    %v1404 = vunpack.c.h.b16 %v797
    %v1405 = vunpack.c.l.b16 %v798
    %v1406 = vunpack.c.h.b16 %v798
    %v1407 = vunpack.c.l.b16 %v799
    %v1408 = vunpack.c.h.b16 %v799
    %v1409 = vunpack.c.l.b16 %v800
    %v1410 = vunpack.c.h.b16 %v800
    %v1411 = vunpack.c.l.b16 %v801
    %v1412 = vunpack.c.h.b16 %v801
    %v1413 = vunpack.c.l.b16 %v802
    %v1414 = vunpack.c.h.b16 %v802
    %v1415 = vunpack.c.l.b16 %v803
    %v1416 = vunpack.c.h.b16 %v803
    %v1417 = vunpack.c.l.b16 %v804
    %v1418 = vunpack.c.h.b16 %v804
    %v1419 = vunpack.c.l.b16 %v805
    %v1420 = vunpack.c.h.b16 %v805
    %v1421 = vunpack.c.l.b16 %v806
    %v1422 = vunpack.c.h.b16 %v806
    %v1423 = vunpack.c.l.b16 %v807
    %v1424 = vunpack.c.h.b16 %v807
    %v1425 = vunpack.c.l.b16 %v808
    %v1426 = vunpack.c.h.b16 %v808
    %v1427 = vunpack.c.l.b16 %v809
    %v1428 = vunpack.c.h.b16 %v809
    %v1429 = vunpack.c.l.b16 %v810
    %v1430 = vunpack.c.h.b16 %v810
    %v1431 = vunpack.c.l.b16 %v811
    %v1432 = vunpack.c.h.b16 %v811
    %v1433 = vunpack.c.l.b16 %v812
    %v1434 = vunpack.c.h.b16 %v812
    %v1435 = vunpack.c.l.b16 %v813
    %v1436 = vunpack.c.h.b16 %v813
    %v1437 = vunpack.c.l.b16 %v814
    %v1438 = vunpack.c.h.b16 %v814
    %v1439 = vunpack.c.l.b16 %v815
    %v1440 = vunpack.c.h.b16 %v815
    %v1441 = vunpack.c.l.b16 %v816
    %v1442 = vunpack.c.h.b16 %v816
    %v1443 = vunpack.c.l.b16 %v817
    %v1444 = vunpack.c.h.b16 %v817
    %v1445 = vunpack.c.l.b16 %v818
    %v1446 = vunpack.c.h.b16 %v818
    %v1447 = vunpack.c.l.b16 %v819
    %v1448 = vunpack.c.h.b16 %v819
    %v1449 = vunpack.c.l.b16 %v820
    %v1450 = vunpack.c.h.b16 %v820
    %v1451 = vunpack.c.l.b16 %v821
    %v1452 = vunpack.c.h.b16 %v821
    %v1453 = vunpack.c.l.b16 %v822
    %v1454 = vunpack.c.h.b16 %v822
    %v1455 = vunpack.c.l.b16 %v823
    %v1456 = vunpack.c.h.b16 %v823
    %v1457 = vunpack.c.l.b16 %v824
    %v1458 = vunpack.c.h.b16 %v824
    %v1459 = vunpack.c.l.b16 %v825
    %v1460 = vunpack.c.h.b16 %v825
    %v1461 = vunpack.c.l.b16 %v826
    %v1462 = vunpack.c.h.b16 %v826
    %v1463 = vunpack.c.l.b16 %v827
    %v1464 = vunpack.c.h.b16 %v827
    %v1465 = vunpack.c.l.b16 %v828
    %v1466 = vunpack.c.h.b16 %v828
    %v1467 = vunpack.c.l.b16 %v829
    %v1468 = vunpack.c.h.b16 %v829
    %v1469 = vunpack.c.l.b16 %v830
    %v1470 = vunpack.c.h.b16 %v830
    %v1471 = vunpack.c.l.b16 %v831
    %v1472 = vunpack.c.h.b16 %v831
    %v1473 = vunpack.c.l.b16 %v832
    %v1474 = vunpack.c.h.b16 %v832
    %v1475 = vunpack.c.l.b16 %v833
    %v1476 = vunpack.c.h.b16 %v833
    %v1477 = vunpack.c.l.b16 %v834
    %v1478 = vunpack.c.h.b16 %v834
    %v1479 = vunpack.c.l.b16 %v835
    %v1480 = vunpack.c.h.b16 %v835
    %v1481 = vunpack.c.l.b16 %v836
    %v1482 = vunpack.c.h.b16 %v836
    %v1483 = vunpack.c.l.b16 %v837
    %v1484 = vunpack.c.h.b16 %v837
    %v1485 = vunpack.c.l.b16 %v838
    %v1486 = vunpack.c.h.b16 %v838
    %v1487 = vunpack.c.l.b16 %v839
    %v1488 = vunpack.c.h.b16 %v839
    %v1489 = vunpack.c.l.b16 %v840
    %v1490 = vunpack.c.h.b16 %v840
    %v1491 = vunpack.c.l.b16 %v841
    %v1492 = vunpack.c.h.b16 %v841
    %v1493 = vunpack.c.l.b16 %v842
    %v1494 = vunpack.c.h.b16 %v842
    %v1495 = vunpack.c.l.b16 %v843
    %v1496 = vunpack.c.h.b16 %v843
    %v1497 = vunpack.c.l.b16 %v844
    %v1498 = vunpack.c.h.b16 %v844
    %v1499 = vunpack.c.l.b16 %v845
    %v1500 = vunpack.c.h.b16 %v845
    %v1501 = vunpack.c.l.b16 %v846
    %v1502 = vunpack.c.h.b16 %v846
    %v1503 = vunpack.c.l.b16 %v847
    %v1504 = vunpack.c.h.b16 %v847
    %v1505 = vunpack.c.l.b16 %v848
    %v1506 = vunpack.c.h.b16 %v848
    %v1507 = vunpack.c.l.b16 %v849
    %v1508 = vunpack.c.h.b16 %v849
    %v1509 = vunpack.c.l.b16 %v850
    %v1510 = vunpack.c.h.b16 %v850
    %v1511 = vunpack.c.l.b16 %v851
    %v1512 = vunpack.c.h.b16 %v851
    %v1513 = vunpack.c.l.b16 %v852
    %v1514 = vunpack.c.h.b16 %v852
    %v1515 = vunpack.c.l.b16 %v853
    %v1516 = vunpack.c.h.b16 %v853
    %v1517 = vunpack.c.l.b16 %v854
    %v1518 = vunpack.c.h.b16 %v854
    %v1519 = vunpack.c.l.b16 %v855
    %v1520 = vunpack.c.h.b16 %v855
    %v1521 = vunpack.c.l.b16 %v856
    %v1522 = vunpack.c.h.b16 %v856
    %v1523 = vunpack.c.l.b16 %v857
    %v1524 = vunpack.c.h.b16 %v857
    %v1525 = vunpack.c.l.b16 %v858
    %v1526 = vunpack.c.h.b16 %v858
    %v1527 = vunpack.c.l.b16 %v859
    %v1528 = vunpack.c.h.b16 %v859
    %v1529 = vunpack.c.l.b16 %v860
    %v1530 = vunpack.c.h.b16 %v860
    %v1531 = vunpack.c.l.b16 %v861
    %v1532 = vunpack.c.h.b16 %v861
    %v1533 = vunpack.c.l.b16 %v862
    %v1534 = vunpack.c.h.b16 %v862
    %v1535 = vunpack.c.l.b16 %v863
    %v1536 = vunpack.c.h.b16 %v863
    %v1537 = vunpack.c.l.b16 %v864
    %v1538 = vunpack.c.h.b16 %v864
    %v1539 = vunpack.c.l.b16 %v865
    %v1540 = vunpack.c.h.b16 %v865
    %v1541 = vunpack.c.l.b16 %v866
    %v1542 = vunpack.c.h.b16 %v866
    %v1543 = vunpack.c.l.b16 %v867
    %v1544 = vunpack.c.h.b16 %v867
    %v1545 = vunpack.c.l.b16 %v868
    %v1546 = vunpack.c.h.b16 %v868
    %v1547 = vunpack.c.l.b16 %v869
    %v1548 = vunpack.c.h.b16 %v869
    %v1549 = vunpack.c.l.b16 %v870
    %v1550 = vunpack.c.h.b16 %v870
    %v1551 = vunpack.c.l.b16 %v871
    %v1552 = vunpack.c.h.b16 %v871
    %v1553 = vunpack.c.l.b16 %v872
    %v1554 = vunpack.c.h.b16 %v872
    %v1555 = vunpack.c.l.b16 %v873
    %v1556 = vunpack.c.h.b16 %v873
    %v1557 = vunpack.c.l.b16 %v874
    %v1558 = vunpack.c.h.b16 %v874
    %v1559 = vunpack.c.l.b16 %v875
    %v1560 = vunpack.c.h.b16 %v875
    %v1561 = vunpack.c.l.b16 %v876
    %v1562 = vunpack.c.h.b16 %v876
    %v1563 = vunpack.c.l.b16 %v877
    %v1564 = vunpack.c.h.b16 %v877
    %v1565 = vunpack.c.l.b16 %v878
    %v1566 = vunpack.c.h.b16 %v878
    %v1567 = vunpack.c.l.b16 %v879
    %v1568 = vunpack.c.h.b16 %v879
    %v1569 = vunpack.c.l.b16 %v880
    %v1570 = vunpack.c.h.b16 %v880
    %v1571 = vunpack.c.l.b16 %v881
    %v1572 = vunpack.c.h.b16 %v881
    %v1573 = vunpack.c.l.b16 %v882
    %v1574 = vunpack.c.h.b16 %v882
    %v1575 = vunpack.c.l.b16 %v883
    %v1576 = vunpack.c.h.b16 %v883
    %v1577 = vunpack.c.l.b16 %v884
    %v1578 = vunpack.c.h.b16 %v884
    %v1579 = vunpack.c.l.b16 %v885
    %v1580 = vunpack.c.h.b16 %v885
    %v1581 = vunpack.c.l.b16 %v886
    %v1582 = vunpack.c.h.b16 %v886
    %v1583 = vunpack.c.l.b16 %v887
    %v1584 = vunpack.c.h.b16 %v887
    %v1585 = vunpack.c.l.b16 %v888
    %v1586 = vunpack.c.h.b16 %v888
    %v1587 = vunpack.c.l.b16 %v889
    %v1588 = vunpack.c.h.b16 %v889
    %v1589 = vunpack.c.l.b16 %v890
    %v1590 = vunpack.c.h.b16 %v890
    %v1591 = vunpack.c.l.b16 %v891
    %v1592 = vunpack.c.h.b16 %v891
    %v1593 = vunpack.c.l.b16 %v892
    %v1594 = vunpack.c.h.b16 %v892
    %v1595 = vunpack.c.l.b16 %v893
    %v1596 = vunpack.c.h.b16 %v893
    %v1597 = vunpack.c.l.b16 %v894
    %v1598 = vunpack.c.h.b16 %v894
    %v1599 = vunpack.c.l.b16 %v895
    %v1600 = vunpack.c.h.b16 %v895
    %v1601 = vunpack.c.l.b16 %v896
    %v1602 = vunpack.c.h.b16 %v896
    %v1603 = vunpack.c.l.b16 %v897
    %v1604 = vunpack.c.h.b16 %v897
    %v1605 = vunpack.c.l.b16 %v898
    %v1606 = vunpack.c.h.b16 %v898
    %v1607 = vunpack.c.l.b16 %v899
    %v1608 = vunpack.c.h.b16 %v899
    %v1609 = vunpack.c.l.b16 %v900
    %v1610 = vunpack.c.h.b16 %v900
    %v1611 = vunpack.c.l.b16 %v901
    %v1612 = vunpack.c.h.b16 %v901
    %v1613 = vunpack.c.l.b16 %v902
    %v1614 = vunpack.c.h.b16 %v902
    %v1615 = vunpack.c.l.b16 %v903
    %v1616 = vunpack.c.h.b16 %v903
    %v1617 = vunpack.c.l.b16 %v904
    %v1618 = vunpack.c.h.b16 %v904
    %v1619 = vunpack.c.l.b16 %v905
    %v1620 = vunpack.c.h.b16 %v905
    %v1621 = vunpack.c.l.b16 %v906
    %v1622 = vunpack.c.h.b16 %v906
    %v1623 = vunpack.c.l.b16 %v907
    %v1624 = vunpack.c.h.b16 %v907
    %v1625 = vunpack.c.l.b16 %v908
    %v1626 = vunpack.c.h.b16 %v908
    %v1627 = vunpack.c.l.b16 %v909
    %v1628 = vunpack.c.h.b16 %v909
    %v1629 = vunpack.c.l.b16 %v910
    %v1630 = vunpack.c.h.b16 %v910
    %v1631 = vunpack.c.l.b16 %v911
    %v1632 = vunpack.c.h.b16 %v911
    %v1633 = vunpack.c.l.b16 %v912
    %v1634 = vunpack.c.h.b16 %v912
    %v1635 = vunpack.c.l.b16 %v913
    %v1636 = vunpack.c.h.b16 %v913
    %v1637 = vunpack.c.l.b16 %v914
    %v1638 = vunpack.c.h.b16 %v914
    %v1639 = vunpack.c.l.b16 %v915
    %v1640 = vunpack.c.h.b16 %v915
    %v1641 = vunpack.c.l.b16 %v916
    %v1642 = vunpack.c.h.b16 %v916
    %v1643 = vunpack.c.l.b16 %v917
    %v1644 = vunpack.c.h.b16 %v917
    %v1645 = vunpack.c.l.b16 %v918
    %v1646 = vunpack.c.h.b16 %v918
    %v1647 = vunpack.c.l.b16 %v919
    %v1648 = vunpack.c.h.b16 %v919
    %v1649 = vunpack.c.l.b16 %v920
    %v1650 = vunpack.c.h.b16 %v920
    %v1651 = vunpack.c.l.b16 %v921
    %v1652 = vunpack.c.h.b16 %v921
    %v1653 = vunpack.c.l.b16 %v922
    %v1654 = vunpack.c.h.b16 %v922
    %v1655 = vunpack.c.l.b16 %v923
    %v1656 = vunpack.c.h.b16 %v923
    %v1657 = vunpack.c.l.b16 %v924
    %v1658 = vunpack.c.h.b16 %v924
    %v1659 = vunpack.c.l.b16 %v925
    %v1660 = vunpack.c.h.b16 %v925
    %v1661 = vunpack.c.l.b16 %v926
    %v1662 = vunpack.c.h.b16 %v926
    %v1663 = vunpack.c.l.b16 %v927
    %v1664 = vunpack.c.h.b16 %v927
    %v1665 = vunpack.c.l.b16 %v928
    %v1666 = vunpack.c.h.b16 %v928
    %v1667 = vunpack.c.l.b16 %v929
    %v1668 = vunpack.c.h.b16 %v929
    %v1669 = vunpack.c.l.b16 %v930
    %v1670 = vunpack.c.h.b16 %v930
    %v1671 = vunpack.c.l.b16 %v931
    %v1672 = vunpack.c.h.b16 %v931
    %v1673 = vunpack.c.l.b16 %v932
    %v1674 = vunpack.c.h.b16 %v932
    %v1675 = vunpack.c.l.b16 %v933
    %v1676 = vunpack.c.h.b16 %v933
    %v1677 = vunpack.c.l.b16 %v934
    %v1678 = vunpack.c.h.b16 %v934
    %v1679 = vunpack.c.l.b16 %v935
    %v1680 = vunpack.c.h.b16 %v935
    %v1681 = vunpack.c.l.b16 %v936
    %v1682 = vunpack.c.h.b16 %v936
    %v1683 = vunpack.c.l.b16 %v937
    %v1684 = vunpack.c.h.b16 %v937
    %v1685 = vunpack.c.l.b16 %v938
    %v1686 = vunpack.c.h.b16 %v938
    %v1687 = vunpack.c.l.b16 %v939
    %v1688 = vunpack.c.h.b16 %v939
    %v1689 = vunpack.c.l.b16 %v940
    %v1690 = vunpack.c.h.b16 %v940
    %v1691 = vunpack.c.l.b16 %v941
    %v1692 = vunpack.c.h.b16 %v941
    %v1693 = vunpack.c.l.b16 %v942
    %v1694 = vunpack.c.h.b16 %v942
    %v1695 = vunpack.c.l.b16 %v943
    %v1696 = vunpack.c.h.b16 %v943
    %v1697 = vunpack.c.l.b16 %v944
    %v1698 = vunpack.c.h.b16 %v944
    %v1699 = vunpack.c.l.b16 %v945
    %v1700 = vunpack.c.h.b16 %v945
    %v1701 = vunpack.c.l.b16 %v946
    %v1702 = vunpack.c.h.b16 %v946
    %v1703 = vunpack.c.l.b16 %v947
    %v1704 = vunpack.c.h.b16 %v947
    %v1705 = vunpack.c.l.b16 %v948
    %v1706 = vunpack.c.h.b16 %v948
    %v1707 = vunpack.c.l.b16 %v949
    %v1708 = vunpack.c.h.b16 %v949
    %v1709 = vunpack.c.l.b16 %v950
    %v1710 = vunpack.c.h.b16 %v950
    %v1711 = vunpack.c.l.b16 %v951
    %v1712 = vunpack.c.h.b16 %v951
    %v1713 = vunpack.c.l.b16 %v952
    %v1714 = vunpack.c.h.b16 %v952
    %v1715 = vunpack.c.l.b16 %v953
    %v1716 = vunpack.c.h.b16 %v953
    %v1717 = vunpack.c.l.b16 %v954
    %v1718 = vunpack.c.h.b16 %v954
    %v1719 = vunpack.c.l.b16 %v955
    %v1720 = vunpack.c.h.b16 %v955
    %v1721 = vunpack.c.l.b16 %v956
    %v1722 = vunpack.c.h.b16 %v956
    %v1723 = vunpack.c.l.b16 %v957
    %v1724 = vunpack.c.h.b16 %v957
    %v1725 = vunpack.c.l.b16 %v958
    %v1726 = vunpack.c.h.b16 %v958
    %v1727 = vunpack.c.l.b16 %v959
    %v1728 = vunpack.c.h.b16 %v959
    %v1729 = vunpack.c.l.b16 %v960
    %v1730 = vunpack.c.h.b16 %v960
    %v1731 = vunpack.c.l.b16 %v961
    %v1732 = vunpack.c.h.b16 %v961
    %v1733 = vunpack.c.l.b16 %v962
    %v1734 = vunpack.c.h.b16 %v962
    %v1735 = vunpack.c.l.b16 %v963
    %v1736 = vunpack.c.h.b16 %v963
    %v1737 = vunpack.c.l.b16 %v964
    %v1738 = vunpack.c.h.b16 %v964
    %v1739 = vunpack.c.l.b16 %v965
    %v1740 = vunpack.c.h.b16 %v965
    %v1741 = vunpack.c.l.b16 %v966
    %v1742 = vunpack.c.h.b16 %v966
    %v1743 = vunpack.c.l.b16 %v967
    %v1744 = vunpack.c.h.b16 %v967
    %v1745 = vunpack.c.l.b16 %v968
    %v1746 = vunpack.c.h.b16 %v968
    %v1747 = vunpack.c.l.b16 %v969
    %v1748 = vunpack.c.h.b16 %v969
    %v1749 = vunpack.c.l.b16 %v970
    %v1750 = vunpack.c.h.b16 %v970
    %v1751 = vunpack.c.l.b16 %v971
    %v1752 = vunpack.c.h.b16 %v971
    %v1753 = vunpack.c.l.b16 %v972
    %v1754 = vunpack.c.h.b16 %v972
    %v1755 = vunpack.c.l.b16 %v973
    %v1756 = vunpack.c.h.b16 %v973
    %v1757 = vunpack.c.l.b16 %v974
    %v1758 = vunpack.c.h.b16 %v974
    %v1759 = vunpack.c.l.b16 %v975
    %v1760 = vunpack.c.h.b16 %v975
    %v1761 = vunpack.c.l.b16 %v976
    %v1762 = vunpack.c.h.b16 %v976
    %v1763 = vunpack.c.l.b16 %v977
    %v1764 = vunpack.c.h.b16 %v977
    %v1765 = vunpack.c.l.b16 %v978
    %v1766 = vunpack.c.h.b16 %v978
    %v1767 = vunpack.c.l.b16 %v979
    %v1768 = vunpack.c.h.b16 %v979
    %v1769 = vunpack.c.l.b16 %v980
    %v1770 = vunpack.c.h.b16 %v980
    %v1771 = vpack.c.b16 %v1263, %v1259
    %v1772 = vpack.c.b16 %v1264, %v1260
    %v1773 = vpack.c.b16 %v1265, %v1261
    %v1774 = vpack.c.b16 %v1266, %v1262
    %v1775 = vpack.c.b16 %v1271, %v1267
    %v1776 = vpack.c.b16 %v1272, %v1268
    %v1777 = vpack.c.b16 %v1273, %v1269
    %v1778 = vpack.c.b16 %v1274, %v1270
    %v1779 = vpack.c.b16 %v1279, %v1275
    %v1780 = vpack.c.b16 %v1280, %v1276
    %v1781 = vpack.c.b16 %v1281, %v1277
    %v1782 = vpack.c.b16 %v1282, %v1278
    %v1783 = vpack.c.b16 %v1287, %v1283
    %v1784 = vpack.c.b16 %v1288, %v1284
    %v1785 = vpack.c.b16 %v1289, %v1285
    %v1786 = vpack.c.b16 %v1290, %v1286
    %v1787 = vpack.c.b16 %v1295, %v1291
    %v1788 = vpack.c.b16 %v1296, %v1292
    %v1789 = vpack.c.b16 %v1297, %v1293
    %v1790 = vpack.c.b16 %v1298, %v1294
    %v1791 = vpack.c.b16 %v1303, %v1299
    %v1792 = vpack.c.b16 %v1304, %v1300
    %v1793 = vpack.c.b16 %v1305, %v1301
    %v1794 = vpack.c.b16 %v1306, %v1302
    %v1795 = vpack.c.b16 %v1311, %v1307
    %v1796 = vpack.c.b16 %v1312, %v1308
    %v1797 = vpack.c.b16 %v1313, %v1309
    %v1798 = vpack.c.b16 %v1314, %v1310
    %v1799 = vpack.c.b16 %v1319, %v1315
    %v1800 = vpack.c.b16 %v1320, %v1316
    %v1801 = vpack.c.b16 %v1321, %v1317
    %v1802 = vpack.c.b16 %v1322, %v1318
    %v1803 = vpack.c.b16 %v1327, %v1323
    %v1804 = vpack.c.b16 %v1328, %v1324
    %v1805 = vpack.c.b16 %v1329, %v1325
    %v1806 = vpack.c.b16 %v1330, %v1326
    %v1807 = vpack.c.b16 %v1335, %v1331
    %v1808 = vpack.c.b16 %v1336, %v1332
    %v1809 = vpack.c.b16 %v1337, %v1333
    %v1810 = vpack.c.b16 %v1338, %v1334
    %v1811 = vpack.c.b16 %v1343, %v1339
    %v1812 = vpack.c.b16 %v1344, %v1340
    %v1813 = vpack.c.b16 %v1345, %v1341
    %v1814 = vpack.c.b16 %v1346, %v1342
    %v1815 = vpack.c.b16 %v1351, %v1347
    %v1816 = vpack.c.b16 %v1352, %v1348
    %v1817 = vpack.c.b16 %v1353, %v1349
    %v1818 = vpack.c.b16 %v1354, %v1350
    %v1819 = vpack.c.b16 %v1359, %v1355
    %v1820 = vpack.c.b16 %v1360, %v1356
    %v1821 = vpack.c.b16 %v1361, %v1357
    %v1822 = vpack.c.b16 %v1362, %v1358
    %v1823 = vpack.c.b16 %v1367, %v1363
    %v1824 = vpack.c.b16 %v1368, %v1364
    %v1825 = vpack.c.b16 %v1369, %v1365
    %v1826 = vpack.c.b16 %v1370, %v1366
    %v1827 = vpack.c.b16 %v1375, %v1371
    %v1828 = vpack.c.b16 %v1376, %v1372
    %v1829 = vpack.c.b16 %v1377, %v1373
    %v1830 = vpack.c.b16 %v1378, %v1374
    %v1831 = vpack.c.b16 %v1383, %v1379
    %v1832 = vpack.c.b16 %v1384, %v1380
    %v1833 = vpack.c.b16 %v1385, %v1381
    %v1834 = vpack.c.b16 %v1386, %v1382
    %v1835 = vpack.c.b16 %v1391, %v1387
    %v1836 = vpack.c.b16 %v1392, %v1388
    %v1837 = vpack.c.b16 %v1393, %v1389
    %v1838 = vpack.c.b16 %v1394, %v1390
    %v1839 = vpack.c.b16 %v1399, %v1395
    %v1840 = vpack.c.b16 %v1400, %v1396
    %v1841 = vpack.c.b16 %v1401, %v1397
    %v1842 = vpack.c.b16 %v1402, %v1398
    %v1843 = vpack.c.b16 %v1407, %v1403
    %v1844 = vpack.c.b16 %v1408, %v1404
    %v1845 = vpack.c.b16 %v1409, %v1405
    %v1846 = vpack.c.b16 %v1410, %v1406
    %v1847 = vpack.c.b16 %v1415, %v1411
    %v1848 = vpack.c.b16 %v1416, %v1412
    %v1849 = vpack.c.b16 %v1417, %v1413
    %v1850 = vpack.c.b16 %v1418, %v1414
    %v1851 = vpack.c.b16 %v1423, %v1419
    %v1852 = vpack.c.b16 %v1424, %v1420
    %v1853 = vpack.c.b16 %v1425, %v1421
    %v1854 = vpack.c.b16 %v1426, %v1422
    %v1855 = vpack.c.b16 %v1431, %v1427
    %v1856 = vpack.c.b16 %v1432, %v1428
    %v1857 = vpack.c.b16 %v1433, %v1429
    %v1858 = vpack.c.b16 %v1434, %v1430
    %v1859 = vpack.c.b16 %v1439, %v1435
    %v1860 = vpack.c.b16 %v1440, %v1436
    %v1861 = vpack.c.b16 %v1441, %v1437
    %v1862 = vpack.c.b16 %v1442, %v1438
    %v1863 = vpack.c.b16 %v1447, %v1443
    %v1864 = vpack.c.b16 %v1448, %v1444
    %v1865 = vpack.c.b16 %v1449, %v1445
    %v1866 = vpack.c.b16 %v1450, %v1446
    %v1867 = vpack.c.b16 %v1455, %v1451
    %v1868 = vpack.c.b16 %v1456, %v1452
    %v1869 = vpack.c.b16 %v1457, %v1453
    %v1870 = vpack.c.b16 %v1458, %v1454
    %v1871 = vpack.c.b16 %v1463, %v1459
    %v1872 = vpack.c.b16 %v1464, %v1460
    %v1873 = vpack.c.b16 %v1465, %v1461
    %v1874 = vpack.c.b16 %v1466, %v1462
    %v1875 = vpack.c.b16 %v1471, %v1467
    %v1876 = vpack.c.b16 %v1472, %v1468
    %v1877 = vpack.c.b16 %v1473, %v1469
    %v1878 = vpack.c.b16 %v1474, %v1470
    %v1879 = vpack.c.b16 %v1479, %v1475
    %v1880 = vpack.c.b16 %v1480, %v1476
    %v1881 = vpack.c.b16 %v1481, %v1477
    %v1882 = vpack.c.b16 %v1482, %v1478
    %v1883 = vpack.c.b16 %v1487, %v1483
    %v1884 = vpack.c.b16 %v1488, %v1484
    %v1885 = vpack.c.b16 %v1489, %v1485
    %v1886 = vpack.c.b16 %v1490, %v1486
    %v1887 = vpack.c.b16 %v1495, %v1491
    %v1888 = vpack.c.b16 %v1496, %v1492
    %v1889 = vpack.c.b16 %v1497, %v1493
    %v1890 = vpack.c.b16 %v1498, %v1494
    %v1891 = vpack.c.b16 %v1503, %v1499
    %v1892 = vpack.c.b16 %v1504, %v1500
    %v1893 = vpack.c.b16 %v1505, %v1501
    %v1894 = vpack.c.b16 %v1506, %v1502
    %v1895 = vpack.c.b16 %v1511, %v1507
    %v1896 = vpack.c.b16 %v1512, %v1508
    %v1897 = vpack.c.b16 %v1513, %v1509
    %v1898 = vpack.c.b16 %v1514, %v1510
    %v1899 = vpack.c.b16 %v1519, %v1515
    %v1900 = vpack.c.b16 %v1520, %v1516
    %v1901 = vpack.c.b16 %v1521, %v1517
    %v1902 = vpack.c.b16 %v1522, %v1518
    %v1903 = vpack.c.b16 %v1527, %v1523
    %v1904 = vpack.c.b16 %v1528, %v1524
    %v1905 = vpack.c.b16 %v1529, %v1525
    %v1906 = vpack.c.b16 %v1530, %v1526
    %v1907 = vpack.c.b16 %v1535, %v1531
    %v1908 = vpack.c.b16 %v1536, %v1532
    %v1909 = vpack.c.b16 %v1537, %v1533
    %v1910 = vpack.c.b16 %v1538, %v1534
    %v1911 = vpack.c.b16 %v1543, %v1539
    %v1912 = vpack.c.b16 %v1544, %v1540
    %v1913 = vpack.c.b16 %v1545, %v1541
    %v1914 = vpack.c.b16 %v1546, %v1542
    %v1915 = vpack.c.b16 %v1551, %v1547
    %v1916 = vpack.c.b16 %v1552, %v1548
    %v1917 = vpack.c.b16 %v1553, %v1549
    %v1918 = vpack.c.b16 %v1554, %v1550
    %v1919 = vpack.c.b16 %v1559, %v1555
    %v1920 = vpack.c.b16 %v1560, %v1556
    %v1921 = vpack.c.b16 %v1561, %v1557
    %v1922 = vpack.c.b16 %v1562, %v1558
    %v1923 = vpack.c.b16 %v1567, %v1563
    %v1924 = vpack.c.b16 %v1568, %v1564
    %v1925 = vpack.c.b16 %v1569, %v1565
    %v1926 = vpack.c.b16 %v1570, %v1566
    %v1927 = vpack.c.b16 %v1575, %v1571
    %v1928 = vpack.c.b16 %v1576, %v1572
    %v1929 = vpack.c.b16 %v1577, %v1573
    %v1930 = vpack.c.b16 %v1578, %v1574
    %v1931 = vpack.c.b16 %v1583, %v1579
    %v1932 = vpack.c.b16 %v1584, %v1580
    %v1933 = vpack.c.b16 %v1585, %v1581
    %v1934 = vpack.c.b16 %v1586, %v1582
    %v1935 = vpack.c.b16 %v1591, %v1587
    %v1936 = vpack.c.b16 %v1592, %v1588
    %v1937 = vpack.c.b16 %v1593, %v1589
    %v1938 = vpack.c.b16 %v1594, %v1590
    %v1939 = vpack.c.b16 %v1599, %v1595
    %v1940 = vpack.c.b16 %v1600, %v1596
    %v1941 = vpack.c.b16 %v1601, %v1597
    %v1942 = vpack.c.b16 %v1602, %v1598
    %v1943 = vpack.c.b16 %v1607, %v1603
    %v1944 = vpack.c.b16 %v1608, %v1604
    %v1945 = vpack.c.b16 %v1609, %v1605
    %v1946 = vpack.c.b16 %v1610, %v1606
    %v1947 = vpack.c.b16 %v1615, %v1611
    %v1948 = vpack.c.b16 %v1616, %v1612
    %v1949 = vpack.c.b16 %v1617, %v1613
    %v1950 = vpack.c.b16 %v1618, %v1614
    %v1951 = vpack.c.b16 %v1623, %v1619
    %v1952 = vpack.c.b16 %v1624, %v1620
    %v1953 = vpack.c.b16 %v1625, %v1621
    %v1954 = vpack.c.b16 %v1626, %v1622
    %v1955 = vpack.c.b16 %v1631, %v1627
    %v1956 = vpack.c.b16 %v1632, %v1628
    %v1957 = vpack.c.b16 %v1633, %v1629
    %v1958 = vpack.c.b16 %v1634, %v1630
    %v1959 = vpack.c.b16 %v1639, %v1635
    %v1960 = vpack.c.b16 %v1640, %v1636
    %v1961 = vpack.c.b16 %v1641, %v1637
    %v1962 = vpack.c.b16 %v1642, %v1638
    %v1963 = vpack.c.b16 %v1647, %v1643
    %v1964 = vpack.c.b16 %v1648, %v1644
    %v1965 = vpack.c.b16 %v1649, %v1645
    %v1966 = vpack.c.b16 %v1650, %v1646
    %v1967 = vpack.c.b16 %v1655, %v1651
    %v1968 = vpack.c.b16 %v1656, %v1652
    %v1969 = vpack.c.b16 %v1657, %v1653
    %v1970 = vpack.c.b16 %v1658, %v1654
    %v1971 = vpack.c.b16 %v1663, %v1659
    %v1972 = vpack.c.b16 %v1664, %v1660
    %v1973 = vpack.c.b16 %v1665, %v1661
    %v1974 = vpack.c.b16 %v1666, %v1662
    %v1975 = vpack.c.b16 %v1671, %v1667
    %v1976 = vpack.c.b16 %v1672, %v1668
    %v1977 = vpack.c.b16 %v1673, %v1669
    %v1978 = vpack.c.b16 %v1674, %v1670
    %v1979 = vpack.c.b16 %v1679, %v1675
    %v1980 = vpack.c.b16 %v1680, %v1676
    %v1981 = vpack.c.b16 %v1681, %v1677
    %v1982 = vpack.c.b16 %v1682, %v1678
    %v1983 = vpack.c.b16 %v1687, %v1683
    %v1984 = vpack.c.b16 %v1688, %v1684
    %v1985 = vpack.c.b16 %v1689, %v1685
    %v1986 = vpack.c.b16 %v1690, %v1686
    %v1987 = vpack.c.b16 %v1695, %v1691
    %v1988 = vpack.c.b16 %v1696, %v1692
    %v1989 = vpack.c.b16 %v1697, %v1693
    %v1990 = vpack.c.b16 %v1698, %v1694
    %v1991 = vpack.c.b16 %v1703, %v1699
    %v1992 = vpack.c.b16 %v1704, %v1700
    %v1993 = vpack.c.b16 %v1705, %v1701
    %v1994 = vpack.c.b16 %v1706, %v1702
    %v1995 = vpack.c.b16 %v1711, %v1707
    %v1996 = vpack.c.b16 %v1712, %v1708
    %v1997 = vpack.c.b16 %v1713, %v1709
    %v1998 = vpack.c.b16 %v1714, %v1710
    %v1999 = vpack.c.b16 %v1719, %v1715
    %v2000 = vpack.c.b16 %v1720, %v1716
    %v2001 = vpack.c.b16 %v1721, %v1717
    %v2002 = vpack.c.b16 %v1722, %v1718
    %v2003 = vpack.c.b16 %v1727, %v1723
    %v2004 = vpack.c.b16 %v1728, %v1724
    %v2005 = vpack.c.b16 %v1729, %v1725
    %v2006 = vpack.c.b16 %v1730, %v1726
    %v2007 = vpack.c.b16 %v1735, %v1731
    %v2008 = vpack.c.b16 %v1736, %v1732
    %v2009 = vpack.c.b16 %v1737, %v1733
    %v2010 = vpack.c.b16 %v1738, %v1734
    %v2011 = vpack.c.b16 %v1743, %v1739
    %v2012 = vpack.c.b16 %v1744, %v1740
    %v2013 = vpack.c.b16 %v1745, %v1741
    %v2014 = vpack.c.b16 %v1746, %v1742
    %v2015 = vpack.c.b16 %v1751, %v1747
    %v2016 = vpack.c.b16 %v1752, %v1748
    %v2017 = vpack.c.b16 %v1753, %v1749
    %v2018 = vpack.c.b16 %v1754, %v1750
    %v2019 = vpack.c.b16 %v1759, %v1755
    %v2020 = vpack.c.b16 %v1760, %v1756
    %v2021 = vpack.c.b16 %v1761, %v1757
    %v2022 = vpack.c.b16 %v1762, %v1758
    %v2023 = vpack.c.b16 %v1767, %v1763
    %v2024 = vpack.c.b16 %v1768, %v1764
    %v2025 = vpack.c.b16 %v1769, %v1765
    %v2026 = vpack.c.b16 %v1770, %v1766
    %2283 = vmatprep.subr.bf16.mxu0 %v1772
    %2284 = vmatpush1.bf16.msra.mxu0 %v1771
    %2285 = vmatprep.subr.bf16.mxu0 %v1776
    %2286 = vmatpush1.bf16.msra.mxu0 %v1775
    %2287 = vmatprep.subr.bf16.mxu0 %v1780
    %2288 = vmatpush1.bf16.msra.mxu0 %v1779
    %2289 = vmatprep.subr.bf16.mxu0 %v1784
    %2290 = vmatpush1.bf16.msra.mxu0 %v1783
    %2291 = vmatprep.subr.bf16.mxu0 %v1788
    %2292 = vmatpush1.bf16.msra.mxu0 %v1787
    %2293 = vmatprep.subr.bf16.mxu0 %v1792
    %2294 = vmatpush1.bf16.msra.mxu0 %v1791
    %2295 = vmatprep.subr.bf16.mxu0 %v1796
    %2296 = vmatpush1.bf16.msra.mxu0 %v1795
    %2297 = vmatprep.subr.bf16.mxu0 %v1800
    %2298 = vmatpush1.bf16.msra.mxu0 %v1799
    %2299 = vmatprep.subr.bf16.mxu0 %v1804
    %2300 = vmatpush1.bf16.msra.mxu0 %v1803
    %2301 = vmatprep.subr.bf16.mxu0 %v1808
    %2302 = vmatpush1.bf16.msra.mxu0 %v1807
    %2303 = vmatprep.subr.bf16.mxu0 %v1812
    %2304 = vmatpush1.bf16.msra.mxu0 %v1811
    %2305 = vmatprep.subr.bf16.mxu0 %v1816
    %2306 = vmatpush1.bf16.msra.mxu0 %v1815
    %2307 = vmatprep.subr.bf16.mxu0 %v1820
    %2308 = vmatpush1.bf16.msra.mxu0 %v1819
    %2309 = vmatprep.subr.bf16.mxu0 %v1824
    %2310 = vmatpush1.bf16.msra.mxu0 %v1823
    %2311 = vmatprep.subr.bf16.mxu0 %v1828
    %2312 = vmatpush1.bf16.msra.mxu0 %v1827
    %2313 = vmatprep.subr.bf16.mxu0 %v1832
    %2314 = vmatpush1.bf16.msra.mxu0 %v1831
    %2315 = vmatprep.mubr.bf16.mxu0 %v718
    %2316 = vmatmul.mubr.bf16.gmra.mrb[0].mxu0 %v717
    %v2317 = vpop.f32.mrb[0].mxu0
    %v2318 = vadd.f32 %v986, %v2317
    %v2319 = vpop.f32.mrb[0].mxu0
    %v2320 = vadd.f32 %v990, %v2319
    %v2321 = vpop.f32.mrb[0].mxu0
    %v2322 = vpop.f32.mrb[0].mxu0
    %2323 = vdwg.mxu0
    %2324 = vmatprep.subr.bf16.mxu0 %v1836
    %2325 = vmatpush1.bf16.msra.mxu0 %v1835
    %2326 = vmatprep.subr.bf16.mxu0 %v1840
    %2327 = vmatpush1.bf16.msra.mxu0 %v1839
    %2328 = vmatprep.subr.bf16.mxu0 %v1844
    %2329 = vmatpush1.bf16.msra.mxu0 %v1843
    %2330 = vmatprep.subr.bf16.mxu0 %v1848
    %2331 = vmatpush1.bf16.msra.mxu0 %v1847
    %2332 = vmatprep.subr.bf16.mxu0 %v1852
    %2333 = vmatpush1.bf16.msra.mxu0 %v1851
    %2334 = vmatprep.subr.bf16.mxu0 %v1856
    %2335 = vmatpush1.bf16.msra.mxu0 %v1855
    %2336 = vmatprep.subr.bf16.mxu0 %v1860
    %2337 = vmatpush1.bf16.msra.mxu0 %v1859
    %2338 = vmatprep.subr.bf16.mxu0 %v1864
    %2339 = vmatpush1.bf16.msra.mxu0 %v1863
    %2340 = vmatprep.subr.bf16.mxu0 %v1868
    %2341 = vmatpush1.bf16.msra.mxu0 %v1867
    %2342 = vmatprep.subr.bf16.mxu0 %v1872
    %2343 = vmatpush1.bf16.msra.mxu0 %v1871
    %2344 = vmatprep.subr.bf16.mxu0 %v1876
    %2345 = vmatpush1.bf16.msra.mxu0 %v1875
    %2346 = vmatprep.subr.bf16.mxu0 %v1880
    %2347 = vmatpush1.bf16.msra.mxu0 %v1879
    %2348 = vmatprep.subr.bf16.mxu0 %v1884
    %2349 = vmatpush1.bf16.msra.mxu0 %v1883
    %2350 = vmatprep.subr.bf16.mxu0 %v1888
    %2351 = vmatpush1.bf16.msra.mxu0 %v1887
    %2352 = vmatprep.subr.bf16.mxu0 %v1892
    %2353 = vmatpush1.bf16.msra.mxu0 %v1891
    %2354 = vmatprep.subr.bf16.mxu0 %v1896
    %2355 = vmatpush1.bf16.msra.mxu0 %v1895
    %2356 = vmatprep.mubr.bf16.mxu0 %v720
    %2357 = vmatmul.mubr.bf16.gmra.mrb[0].mxu0 %v719
    %v2358 = vpop.f32.mrb[0].mxu0
    %v2359 = vadd.f32 %v2318, %v2358
    %v2360 = vpop.f32.mrb[0].mxu0
    %v2361 = vadd.f32 %v2320, %v2360
    %v2362 = vpop.f32.mrb[0].mxu0
    %v2363 = vpop.f32.mrb[0].mxu0
    %2364 = vdwg.mxu0
    %2365 = vmatprep.subr.bf16.mxu0 %v1900
    %2366 = vmatpush1.bf16.msra.mxu0 %v1899
    %2367 = vmatprep.subr.bf16.mxu0 %v1904
    %2368 = vmatpush1.bf16.msra.mxu0 %v1903
    %2369 = vmatprep.subr.bf16.mxu0 %v1908
    %2370 = vmatpush1.bf16.msra.mxu0 %v1907
    %2371 = vmatprep.subr.bf16.mxu0 %v1912
    %2372 = vmatpush1.bf16.msra.mxu0 %v1911
    %2373 = vmatprep.subr.bf16.mxu0 %v1916
    %2374 = vmatpush1.bf16.msra.mxu0 %v1915
    %2375 = vmatprep.subr.bf16.mxu0 %v1920
    %2376 = vmatpush1.bf16.msra.mxu0 %v1919
    %2377 = vmatprep.subr.bf16.mxu0 %v1924
    %2378 = vmatpush1.bf16.msra.mxu0 %v1923
    %2379 = vmatprep.subr.bf16.mxu0 %v1928
    %2380 = vmatpush1.bf16.msra.mxu0 %v1927
    %2381 = vmatprep.subr.bf16.mxu0 %v1932
    %2382 = vmatpush1.bf16.msra.mxu0 %v1931
    %2383 = vmatprep.subr.bf16.mxu0 %v1936
    %2384 = vmatpush1.bf16.msra.mxu0 %v1935
    %2385 = vmatprep.subr.bf16.mxu0 %v1940
    %2386 = vmatpush1.bf16.msra.mxu0 %v1939
    %2387 = vmatprep.subr.bf16.mxu0 %v1944
    %2388 = vmatpush1.bf16.msra.mxu0 %v1943
    %2389 = vmatprep.subr.bf16.mxu0 %v1948
    %2390 = vmatpush1.bf16.msra.mxu0 %v1947
    %2391 = vmatprep.subr.bf16.mxu0 %v1952
    %2392 = vmatpush1.bf16.msra.mxu0 %v1951
    %2393 = vmatprep.subr.bf16.mxu0 %v1956
    %2394 = vmatpush1.bf16.msra.mxu0 %v1955
    %2395 = vmatprep.subr.bf16.mxu0 %v1960
    %2396 = vmatpush1.bf16.msra.mxu0 %v1959
    %2397 = vmatprep.mubr.bf16.mxu0 %v722
    %2398 = vmatmul.mubr.bf16.gmra.mrb[0].mxu0 %v721
    %v2399 = vpop.f32.mrb[0].mxu0
    %v2400 = vadd.f32 %v2359, %v2399
    %v2401 = vpop.f32.mrb[0].mxu0
    %v2402 = vadd.f32 %v2361, %v2401
    %v2403 = vpop.f32.mrb[0].mxu0
    %v2404 = vpop.f32.mrb[0].mxu0
    %2405 = vdwg.mxu0
    %2406 = vmatprep.subr.bf16.mxu0 %v1964
    %2407 = vmatpush1.bf16.msra.mxu0 %v1963
    %2408 = vmatprep.subr.bf16.mxu0 %v1968
    %2409 = vmatpush1.bf16.msra.mxu0 %v1967
    %2410 = vmatprep.subr.bf16.mxu0 %v1972
    %2411 = vmatpush1.bf16.msra.mxu0 %v1971
    %2412 = vmatprep.subr.bf16.mxu0 %v1976
    %2413 = vmatpush1.bf16.msra.mxu0 %v1975
    %2414 = vmatprep.subr.bf16.mxu0 %v1980
    %2415 = vmatpush1.bf16.msra.mxu0 %v1979
    %2416 = vmatprep.subr.bf16.mxu0 %v1984
    %2417 = vmatpush1.bf16.msra.mxu0 %v1983
    %2418 = vmatprep.subr.bf16.mxu0 %v1988
    %2419 = vmatpush1.bf16.msra.mxu0 %v1987
    %2420 = vmatprep.subr.bf16.mxu0 %v1992
    %2421 = vmatpush1.bf16.msra.mxu0 %v1991
    %2422 = vmatprep.subr.bf16.mxu0 %v1996
    %2423 = vmatpush1.bf16.msra.mxu0 %v1995
    %2424 = vmatprep.subr.bf16.mxu0 %v2000
    %2425 = vmatpush1.bf16.msra.mxu0 %v1999
    %2426 = vmatprep.subr.bf16.mxu0 %v2004
    %2427 = vmatpush1.bf16.msra.mxu0 %v2003
    %2428 = vmatprep.subr.bf16.mxu0 %v2008
    %2429 = vmatpush1.bf16.msra.mxu0 %v2007
    %2430 = vmatprep.subr.bf16.mxu0 %v2012
    %2431 = vmatpush1.bf16.msra.mxu0 %v2011
    %2432 = vmatprep.subr.bf16.mxu0 %v2016
    %2433 = vmatpush1.bf16.msra.mxu0 %v2015
    %2434 = vmatprep.subr.bf16.mxu0 %v2020
    %2435 = vmatpush1.bf16.msra.mxu0 %v2019
    %2436 = vmatprep.subr.bf16.mxu0 %v2024
    %2437 = vmatpush1.bf16.msra.mxu0 %v2023
    %2438 = vmatprep.mubr.bf16.mxu0 %v724
    %2439 = vmatmul.mubr.bf16.gmra.mrb[0].mxu0 %v723
    %v2440 = vpop.f32.mrb[0].mxu0
    %v2441 = vadd.f32 %v2400, %v2440
    %v2442 = vpop.f32.mrb[0].mxu0
    %v2443 = vadd.f32 %v2402, %v2442
    %v2444 = vpop.f32.mrb[0].mxu0
    %v2445 = vpop.f32.mrb[0].mxu0
    %2446 = vdwg.mxu0
    %2447 = vmatprep.subr.bf16.mxu0 %v1774
    %2448 = vmatpush1.bf16.msra.mxu0 %v1773
    %2449 = vmatprep.subr.bf16.mxu0 %v1778
    %2450 = vmatpush1.bf16.msra.mxu0 %v1777
    %2451 = vmatprep.subr.bf16.mxu0 %v1782
    %2452 = vmatpush1.bf16.msra.mxu0 %v1781
    %2453 = vmatprep.subr.bf16.mxu0 %v1786
    %2454 = vmatpush1.bf16.msra.mxu0 %v1785
    %2455 = vmatprep.subr.bf16.mxu0 %v1790
    %2456 = vmatpush1.bf16.msra.mxu0 %v1789
    %2457 = vmatprep.subr.bf16.mxu0 %v1794
    %2458 = vmatpush1.bf16.msra.mxu0 %v1793
    %2459 = vmatprep.subr.bf16.mxu0 %v1798
    %2460 = vmatpush1.bf16.msra.mxu0 %v1797
    %2461 = vmatprep.subr.bf16.mxu0 %v1802
    %2462 = vmatpush1.bf16.msra.mxu0 %v1801
    %2463 = vmatprep.subr.bf16.mxu0 %v1806
    %2464 = vmatpush1.bf16.msra.mxu0 %v1805
    %2465 = vmatprep.subr.bf16.mxu0 %v1810
    %2466 = vmatpush1.bf16.msra.mxu0 %v1809
    %2467 = vmatprep.subr.bf16.mxu0 %v1814
    %2468 = vmatpush1.bf16.msra.mxu0 %v1813
    %2469 = vmatprep.subr.bf16.mxu0 %v1818
    %2470 = vmatpush1.bf16.msra.mxu0 %v1817
    %2471 = vmatprep.subr.bf16.mxu0 %v1822
    %2472 = vmatpush1.bf16.msra.mxu0 %v1821
    %2473 = vmatprep.subr.bf16.mxu0 %v1826
    %2474 = vmatpush1.bf16.msra.mxu0 %v1825
    %2475 = vmatprep.subr.bf16.mxu0 %v1830
    %2476 = vmatpush1.bf16.msra.mxu0 %v1829
    %2477 = vmatprep.subr.bf16.mxu0 %v1834
    %2478 = vmatpush1.bf16.msra.mxu0 %v1833
    %2479 = vmatprep.mubr.bf16.mxu0 %v718
    %2480 = vmatmul.mubr.bf16.gmra.mrb[0].mxu0 %v717
    %v2481 = vpop.f32.mrb[0].mxu0
    %v2482 = vadd.f32 %v994, %v2481
    %v2483 = vpop.f32.mrb[0].mxu0
    %v2484 = vadd.f32 %v998, %v2483
    %v2485 = vpop.f32.mrb[0].mxu0
    %v2486 = vpop.f32.mrb[0].mxu0
    %2487 = vdwg.mxu0
    %2488 = vmatprep.subr.bf16.mxu0 %v1838
    %2489 = vmatpush1.bf16.msra.mxu0 %v1837
    %2490 = vmatprep.subr.bf16.mxu0 %v1842
    %2491 = vmatpush1.bf16.msra.mxu0 %v1841
    %2492 = vmatprep.subr.bf16.mxu0 %v1846
    %2493 = vmatpush1.bf16.msra.mxu0 %v1845
    %2494 = vmatprep.subr.bf16.mxu0 %v1850
    %2495 = vmatpush1.bf16.msra.mxu0 %v1849
    %2496 = vmatprep.subr.bf16.mxu0 %v1854
    %2497 = vmatpush1.bf16.msra.mxu0 %v1853
    %2498 = vmatprep.subr.bf16.mxu0 %v1858
    %2499 = vmatpush1.bf16.msra.mxu0 %v1857
    %2500 = vmatprep.subr.bf16.mxu0 %v1862
    %2501 = vmatpush1.bf16.msra.mxu0 %v1861
    %2502 = vmatprep.subr.bf16.mxu0 %v1866
    %2503 = vmatpush1.bf16.msra.mxu0 %v1865
    %2504 = vmatprep.subr.bf16.mxu0 %v1870
    %2505 = vmatpush1.bf16.msra.mxu0 %v1869
    %2506 = vmatprep.subr.bf16.mxu0 %v1874
    %2507 = vmatpush1.bf16.msra.mxu0 %v1873
    %2508 = vmatprep.subr.bf16.mxu0 %v1878
    %2509 = vmatpush1.bf16.msra.mxu0 %v1877
    %2510 = vmatprep.subr.bf16.mxu0 %v1882
    %2511 = vmatpush1.bf16.msra.mxu0 %v1881
    %2512 = vmatprep.subr.bf16.mxu0 %v1886
    %2513 = vmatpush1.bf16.msra.mxu0 %v1885
    %2514 = vmatprep.subr.bf16.mxu0 %v1890
    %2515 = vmatpush1.bf16.msra.mxu0 %v1889
    %2516 = vmatprep.subr.bf16.mxu0 %v1894
    %2517 = vmatpush1.bf16.msra.mxu0 %v1893
    %2518 = vmatprep.subr.bf16.mxu0 %v1898
    %2519 = vmatpush1.bf16.msra.mxu0 %v1897
    %2520 = vmatprep.mubr.bf16.mxu0 %v720
    %2521 = vmatmul.mubr.bf16.gmra.mrb[0].mxu0 %v719
    %v2522 = vpop.f32.mrb[0].mxu0
    %v2523 = vadd.f32 %v2482, %v2522
    %v2524 = vpop.f32.mrb[0].mxu0
    %v2525 = vadd.f32 %v2484, %v2524
    %v2526 = vpop.f32.mrb[0].mxu0
    %v2527 = vpop.f32.mrb[0].mxu0
    %2528 = vdwg.mxu0
    %2529 = vmatprep.subr.bf16.mxu0 %v1902
    %2530 = vmatpush1.bf16.msra.mxu0 %v1901
    %2531 = vmatprep.subr.bf16.mxu0 %v1906
    %2532 = vmatpush1.bf16.msra.mxu0 %v1905
    %2533 = vmatprep.subr.bf16.mxu0 %v1910
    %2534 = vmatpush1.bf16.msra.mxu0 %v1909
    %2535 = vmatprep.subr.bf16.mxu0 %v1914
    %2536 = vmatpush1.bf16.msra.mxu0 %v1913
    %2537 = vmatprep.subr.bf16.mxu0 %v1918
    %2538 = vmatpush1.bf16.msra.mxu0 %v1917
    %2539 = vmatprep.subr.bf16.mxu0 %v1922
    %2540 = vmatpush1.bf16.msra.mxu0 %v1921
    %2541 = vmatprep.subr.bf16.mxu0 %v1926
    %2542 = vmatpush1.bf16.msra.mxu0 %v1925
    %2543 = vmatprep.subr.bf16.mxu0 %v1930
    %2544 = vmatpush1.bf16.msra.mxu0 %v1929
    %2545 = vmatprep.subr.bf16.mxu0 %v1934
    %2546 = vmatpush1.bf16.msra.mxu0 %v1933
    %2547 = vmatprep.subr.bf16.mxu0 %v1938
    %2548 = vmatpush1.bf16.msra.mxu0 %v1937
    %2549 = vmatprep.subr.bf16.mxu0 %v1942
    %2550 = vmatpush1.bf16.msra.mxu0 %v1941
    %2551 = vmatprep.subr.bf16.mxu0 %v1946
    %2552 = vmatpush1.bf16.msra.mxu0 %v1945
    %2553 = vmatprep.subr.bf16.mxu0 %v1950
    %2554 = vmatpush1.bf16.msra.mxu0 %v1949
    %2555 = vmatprep.subr.bf16.mxu0 %v1954
    %2556 = vmatpush1.bf16.msra.mxu0 %v1953
    %2557 = vmatprep.subr.bf16.mxu0 %v1958
    %2558 = vmatpush1.bf16.msra.mxu0 %v1957
    %2559 = vmatprep.subr.bf16.mxu0 %v1962
    %2560 = vmatpush1.bf16.msra.mxu0 %v1961
    %2561 = vmatprep.mubr.bf16.mxu0 %v722
    %2562 = vmatmul.mubr.bf16.gmra.mrb[0].mxu0 %v721
    %v2563 = vpop.f32.mrb[0].mxu0
    %v2564 = vadd.f32 %v2523, %v2563
    %v2565 = vpop.f32.mrb[0].mxu0
    %v2566 = vadd.f32 %v2525, %v2565
    %v2567 = vpop.f32.mrb[0].mxu0
    %v2568 = vpop.f32.mrb[0].mxu0
    %2569 = vdwg.mxu0
    %2570 = vmatprep.subr.bf16.mxu0 %v1966
    %2571 = vmatpush1.bf16.msra.mxu0 %v1965
    %2572 = vmatprep.subr.bf16.mxu0 %v1970
    %2573 = vmatpush1.bf16.msra.mxu0 %v1969
    %2574 = vmatprep.subr.bf16.mxu0 %v1974
    %2575 = vmatpush1.bf16.msra.mxu0 %v1973
    %2576 = vmatprep.subr.bf16.mxu0 %v1978
    %2577 = vmatpush1.bf16.msra.mxu0 %v1977
    %2578 = vmatprep.subr.bf16.mxu0 %v1982
    %2579 = vmatpush1.bf16.msra.mxu0 %v1981
    %2580 = vmatprep.subr.bf16.mxu0 %v1986
    %2581 = vmatpush1.bf16.msra.mxu0 %v1985
    %2582 = vmatprep.subr.bf16.mxu0 %v1990
    %2583 = vmatpush1.bf16.msra.mxu0 %v1989
    %2584 = vmatprep.subr.bf16.mxu0 %v1994
    %2585 = vmatpush1.bf16.msra.mxu0 %v1993
    %2586 = vmatprep.subr.bf16.mxu0 %v1998
    %2587 = vmatpush1.bf16.msra.mxu0 %v1997
    %2588 = vmatprep.subr.bf16.mxu0 %v2002
    %2589 = vmatpush1.bf16.msra.mxu0 %v2001
    %2590 = vmatprep.subr.bf16.mxu0 %v2006
    %2591 = vmatpush1.bf16.msra.mxu0 %v2005
    %2592 = vmatprep.subr.bf16.mxu0 %v2010
    %2593 = vmatpush1.bf16.msra.mxu0 %v2009
    %2594 = vmatprep.subr.bf16.mxu0 %v2014
    %2595 = vmatpush1.bf16.msra.mxu0 %v2013
    %2596 = vmatprep.subr.bf16.mxu0 %v2018
    %2597 = vmatpush1.bf16.msra.mxu0 %v2017
    %2598 = vmatprep.subr.bf16.mxu0 %v2022
    %2599 = vmatpush1.bf16.msra.mxu0 %v2021
    %2600 = vmatprep.subr.bf16.mxu0 %v2026
    %2601 = vmatpush1.bf16.msra.mxu0 %v2025
    %2602 = vmatprep.mubr.bf16.mxu0 %v724
    %2603 = vmatmul.mubr.bf16.gmra.mrb[0].mxu0 %v723
    %v2604 = vpop.f32.mrb[0].mxu0
    %v2605 = vadd.f32 %v2564, %v2604
    %v2606 = vpop.f32.mrb[0].mxu0
    %v2607 = vadd.f32 %v2566, %v2606
    %v2608 = vpop.f32.mrb[0].mxu0
    %v2609 = vpop.f32.mrb[0].mxu0
    %2610 = vdwg.mxu0
    %vm2611 = vcmp.gt.f32.partialorder %v2441, 0.0
    %vm2612 = vcmp.gt.f32.partialorder %v2443, 0.0
    %vm2613 = vcmp.gt.f32.partialorder %v2605, 0.0
    %vm2614 = vcmp.gt.f32.partialorder %v2607, 0.0
    %v2615 = vmul.f32 %v2441, 0.2
    %v2616 = vmul.f32 %v2443, 0.2
    %v2617 = vmul.f32 %v2605, 0.2
    %v2618 = vmul.f32 %v2607, 0.2
    %v2619 = vsel %vm2611, %v2441, %v2615
    %v2620 = vsel %vm2612, %v2443, %v2616
    %v2621 = vsel %vm2613, %v2605, %v2617
    %v2622 = vsel %vm2614, %v2607, %v2618
    %v2623 = vpack.c.bf16 %v2619, %v2619
    %v2624 = vpack.c.bf16 %v2620, %v2620
    %v2625 = vpack.c.bf16 %v2621, %v2621
    %v2626 = vpack.c.bf16 %v2622, %v2622
    %v2627 = vld [vmem:[#allocation7] sm:$0xff]
    %v2628 = vld [vmem:[#allocation7 + $0x8] sm:$0xff]
    %v2629 = vld [vmem:[#allocation7 + $0x10] sm:$0xff]
    %v2630 = vld [vmem:[#allocation7 + $0x18] sm:$0xff]
    %v2631 = vld [vmem:[#allocation7 + $0x20] sm:$0xff]
    %v2632 = vld [vmem:[#allocation7 + $0x28] sm:$0xff]
    %v2633 = vld [vmem:[#allocation7 + $0x30] sm:$0xff]
    %v2634 = vld [vmem:[#allocation7 + $0x38] sm:$0xff]
    %v2635 = vld [vmem:[#allocation7 + $0x40] sm:$0xff]
    %v2636 = vld [vmem:[#allocation7 + $0x48] sm:$0xff]
    %v2637 = vld [vmem:[#allocation7 + $0x50] sm:$0xff]
    %v2638 = vld [vmem:[#allocation7 + $0x58] sm:$0xff]
    %v2639 = vld [vmem:[#allocation7 + $0x60] sm:$0xff]
    %v2640 = vld [vmem:[#allocation7 + $0x68] sm:$0xff]
    %v2641 = vld [vmem:[#allocation7 + $0x70] sm:$0xff]
    %v2642 = vld [vmem:[#allocation7 + $0x78] sm:$0xff]
    %v2643 = vld [vmem:[#allocation7 + $0x80] sm:$0xff]
    %v2644 = vld [vmem:[#allocation7 + $0x88] sm:$0xff]
    %v2645 = vld [vmem:[#allocation7 + $0x90] sm:$0xff]
    %v2646 = vld [vmem:[#allocation7 + $0x98] sm:$0xff]
    %v2647 = vld [vmem:[#allocation7 + $0xa0] sm:$0xff]
    %v2648 = vld [vmem:[#allocation7 + $0xa8] sm:$0xff]
    %v2649 = vld [vmem:[#allocation7 + $0xb0] sm:$0xff]
    %v2650 = vld [vmem:[#allocation7 + $0xb8] sm:$0xff]
    %v2651 = vld [vmem:[#allocation7 + $0xc0] sm:$0xff]
    %v2652 = vld [vmem:[#allocation7 + $0xc8] sm:$0xff]
    %v2653 = vld [vmem:[#allocation7 + $0xd0] sm:$0xff]
    %v2654 = vld [vmem:[#allocation7 + $0xd8] sm:$0xff]
    %v2655 = vld [vmem:[#allocation7 + $0xe0] sm:$0xff]
    %v2656 = vld [vmem:[#allocation7 + $0xe8] sm:$0xff]
    %v2657 = vld [vmem:[#allocation7 + $0xf0] sm:$0xff]
    %v2658 = vld [vmem:[#allocation7 + $0xf8] sm:$0xff]
    %v2659 = vld [vmem:[#allocation7 + $0x100] sm:$0xff]
    %v2660 = vld [vmem:[#allocation7 + $0x108] sm:$0xff]
    %v2661 = vld [vmem:[#allocation7 + $0x110] sm:$0xff]
    %v2662 = vld [vmem:[#allocation7 + $0x118] sm:$0xff]
    %v2663 = vld [vmem:[#allocation7 + $0x120] sm:$0xff]
    %v2664 = vld [vmem:[#allocation7 + $0x128] sm:$0xff]
    %v2665 = vld [vmem:[#allocation7 + $0x130] sm:$0xff]
    %v2666 = vld [vmem:[#allocation7 + $0x138] sm:$0xff]
    %v2667 = vld [vmem:[#allocation7 + $0x140] sm:$0xff]
    %v2668 = vld [vmem:[#allocation7 + $0x148] sm:$0xff]
    %v2669 = vld [vmem:[#allocation7 + $0x150] sm:$0xff]
    %v2670 = vld [vmem:[#allocation7 + $0x158] sm:$0xff]
    %v2671 = vld [vmem:[#allocation7 + $0x160] sm:$0xff]
    %v2672 = vld [vmem:[#allocation7 + $0x168] sm:$0xff]
    %v2673 = vld [vmem:[#allocation7 + $0x170] sm:$0xff]
    %v2674 = vld [vmem:[#allocation7 + $0x178] sm:$0xff]
    %v2675 = vld [vmem:[#allocation7 + $0x180] sm:$0xff]
    %v2676 = vld [vmem:[#allocation7 + $0x188] sm:$0xff]
    %v2677 = vld [vmem:[#allocation7 + $0x190] sm:$0xff]
    %v2678 = vld [vmem:[#allocation7 + $0x198] sm:$0xff]
    %v2679 = vld [vmem:[#allocation7 + $0x1a0] sm:$0xff]
    %v2680 = vld [vmem:[#allocation7 + $0x1a8] sm:$0xff]
    %v2681 = vld [vmem:[#allocation7 + $0x1b0] sm:$0xff]
    %v2682 = vld [vmem:[#allocation7 + $0x1b8] sm:$0xff]
    %v2683 = vld [vmem:[#allocation7 + $0x1c0] sm:$0xff]
    %v2684 = vld [vmem:[#allocation7 + $0x1c8] sm:$0xff]
    %v2685 = vld [vmem:[#allocation7 + $0x1d0] sm:$0xff]
    %v2686 = vld [vmem:[#allocation7 + $0x1d8] sm:$0xff]
    %v2687 = vld [vmem:[#allocation7 + $0x1e0] sm:$0xff]
    %v2688 = vld [vmem:[#allocation7 + $0x1e8] sm:$0xff]
    %v2689 = vld [vmem:[#allocation7 + $0x1f0] sm:$0xff]
    %v2690 = vld [vmem:[#allocation7 + $0x1f8] sm:$0xff]
    %v2691 = vld [vmem:[%s6] sm:$0x3]
    %v2693 = vlaneseq
    %v2694 = vshrl.u32 %v2693, 7
    %v2695 = vsub.s32 0, %v2694
    %v2696 = vrot.slane %v2691, %v2695
    %v2697 = vlaneseq
    %v2698 = vshrl.u32 %v2697, 7
    %v2699 = vsub.s32 1, %v2698
    %v2700 = vrot.slane %v2691, %v2699
    %v2767 = vunpack.c.l.b16 %v2627
    %v2768 = vunpack.c.h.b16 %v2627
    %v2769 = vunpack.c.l.b16 %v2628
    %v2770 = vunpack.c.h.b16 %v2628
    %v2771 = vunpack.c.l.b16 %v2629
    %v2772 = vunpack.c.h.b16 %v2629
    %v2773 = vunpack.c.l.b16 %v2630
    %v2774 = vunpack.c.h.b16 %v2630
    %v2775 = vunpack.c.l.b16 %v2631
    %v2776 = vunpack.c.h.b16 %v2631
    %v2777 = vunpack.c.l.b16 %v2632
    %v2778 = vunpack.c.h.b16 %v2632
    %v2779 = vunpack.c.l.b16 %v2633
    %v2780 = vunpack.c.h.b16 %v2633
    %v2781 = vunpack.c.l.b16 %v2634
    %v2782 = vunpack.c.h.b16 %v2634
    %v2783 = vunpack.c.l.b16 %v2635
    %v2784 = vunpack.c.h.b16 %v2635
    %v2785 = vunpack.c.l.b16 %v2636
    %v2786 = vunpack.c.h.b16 %v2636
    %v2787 = vunpack.c.l.b16 %v2637
    %v2788 = vunpack.c.h.b16 %v2637
    %v2789 = vunpack.c.l.b16 %v2638
    %v2790 = vunpack.c.h.b16 %v2638
    %v2791 = vunpack.c.l.b16 %v2639
    %v2792 = vunpack.c.h.b16 %v2639
    %v2793 = vunpack.c.l.b16 %v2640
    %v2794 = vunpack.c.h.b16 %v2640
    %v2795 = vunpack.c.l.b16 %v2641
    %v2796 = vunpack.c.h.b16 %v2641
    %v2797 = vunpack.c.l.b16 %v2642
    %v2798 = vunpack.c.h.b16 %v2642
    %v2799 = vunpack.c.l.b16 %v2643
    %v2800 = vunpack.c.h.b16 %v2643
    %v2801 = vunpack.c.l.b16 %v2644
    %v2802 = vunpack.c.h.b16 %v2644
    %v2803 = vunpack.c.l.b16 %v2645
    %v2804 = vunpack.c.h.b16 %v2645
    %v2805 = vunpack.c.l.b16 %v2646
    %v2806 = vunpack.c.h.b16 %v2646
    %v2807 = vunpack.c.l.b16 %v2647
    %v2808 = vunpack.c.h.b16 %v2647
    %v2809 = vunpack.c.l.b16 %v2648
    %v2810 = vunpack.c.h.b16 %v2648
    %v2811 = vunpack.c.l.b16 %v2649
    %v2812 = vunpack.c.h.b16 %v2649
    %v2813 = vunpack.c.l.b16 %v2650
    %v2814 = vunpack.c.h.b16 %v2650
    %v2815 = vunpack.c.l.b16 %v2651
    %v2816 = vunpack.c.h.b16 %v2651
    %v2817 = vunpack.c.l.b16 %v2652
    %v2818 = vunpack.c.h.b16 %v2652
    %v2819 = vunpack.c.l.b16 %v2653
    %v2820 = vunpack.c.h.b16 %v2653
    %v2821 = vunpack.c.l.b16 %v2654
    %v2822 = vunpack.c.h.b16 %v2654
    %v2823 = vunpack.c.l.b16 %v2655
    %v2824 = vunpack.c.h.b16 %v2655
    %v2825 = vunpack.c.l.b16 %v2656
    %v2826 = vunpack.c.h.b16 %v2656
    %v2827 = vunpack.c.l.b16 %v2657
    %v2828 = vunpack.c.h.b16 %v2657
    %v2829 = vunpack.c.l.b16 %v2658
    %v2830 = vunpack.c.h.b16 %v2658
    %v2831 = vunpack.c.l.b16 %v2659
    %v2832 = vunpack.c.h.b16 %v2659
    %v2833 = vunpack.c.l.b16 %v2660
    %v2834 = vunpack.c.h.b16 %v2660
    %v2835 = vunpack.c.l.b16 %v2661
    %v2836 = vunpack.c.h.b16 %v2661
    %v2837 = vunpack.c.l.b16 %v2662
    %v2838 = vunpack.c.h.b16 %v2662
    %v2839 = vunpack.c.l.b16 %v2663
    %v2840 = vunpack.c.h.b16 %v2663
    %v2841 = vunpack.c.l.b16 %v2664
    %v2842 = vunpack.c.h.b16 %v2664
    %v2843 = vunpack.c.l.b16 %v2665
    %v2844 = vunpack.c.h.b16 %v2665
    %v2845 = vunpack.c.l.b16 %v2666
    %v2846 = vunpack.c.h.b16 %v2666
    %v2847 = vunpack.c.l.b16 %v2667
    %v2848 = vunpack.c.h.b16 %v2667
    %v2849 = vunpack.c.l.b16 %v2668
    %v2850 = vunpack.c.h.b16 %v2668
    %v2851 = vunpack.c.l.b16 %v2669
    %v2852 = vunpack.c.h.b16 %v2669
    %v2853 = vunpack.c.l.b16 %v2670
    %v2854 = vunpack.c.h.b16 %v2670
    %v2855 = vunpack.c.l.b16 %v2671
    %v2856 = vunpack.c.h.b16 %v2671
    %v2857 = vunpack.c.l.b16 %v2672
    %v2858 = vunpack.c.h.b16 %v2672
    %v2859 = vunpack.c.l.b16 %v2673
    %v2860 = vunpack.c.h.b16 %v2673
    %v2861 = vunpack.c.l.b16 %v2674
    %v2862 = vunpack.c.h.b16 %v2674
    %v2863 = vunpack.c.l.b16 %v2675
    %v2864 = vunpack.c.h.b16 %v2675
    %v2865 = vunpack.c.l.b16 %v2676
    %v2866 = vunpack.c.h.b16 %v2676
    %v2867 = vunpack.c.l.b16 %v2677
    %v2868 = vunpack.c.h.b16 %v2677
    %v2869 = vunpack.c.l.b16 %v2678
    %v2870 = vunpack.c.h.b16 %v2678
    %v2871 = vunpack.c.l.b16 %v2679
    %v2872 = vunpack.c.h.b16 %v2679
    %v2873 = vunpack.c.l.b16 %v2680
    %v2874 = vunpack.c.h.b16 %v2680
    %v2875 = vunpack.c.l.b16 %v2681
    %v2876 = vunpack.c.h.b16 %v2681
    %v2877 = vunpack.c.l.b16 %v2682
    %v2878 = vunpack.c.h.b16 %v2682
    %v2879 = vunpack.c.l.b16 %v2683
    %v2880 = vunpack.c.h.b16 %v2683
    %v2881 = vunpack.c.l.b16 %v2684
    %v2882 = vunpack.c.h.b16 %v2684
    %v2883 = vunpack.c.l.b16 %v2685
    %v2884 = vunpack.c.h.b16 %v2685
    %v2885 = vunpack.c.l.b16 %v2686
    %v2886 = vunpack.c.h.b16 %v2686
    %v2887 = vunpack.c.l.b16 %v2687
    %v2888 = vunpack.c.h.b16 %v2687
    %v2889 = vunpack.c.l.b16 %v2688
    %v2890 = vunpack.c.h.b16 %v2688
    %v2891 = vunpack.c.l.b16 %v2689
    %v2892 = vunpack.c.h.b16 %v2689
    %v2893 = vunpack.c.l.b16 %v2690
    %v2894 = vunpack.c.h.b16 %v2690
    %v2895 = vpack.c.b16 %v2769, %v2767
    %v2896 = vpack.c.b16 %v2770, %v2768
    %v2897 = vpack.c.b16 %v2773, %v2771
    %v2898 = vpack.c.b16 %v2774, %v2772
    %v2899 = vpack.c.b16 %v2777, %v2775
    %v2900 = vpack.c.b16 %v2778, %v2776
    %v2901 = vpack.c.b16 %v2781, %v2779
    %v2902 = vpack.c.b16 %v2782, %v2780
    %v2903 = vpack.c.b16 %v2785, %v2783
    %v2904 = vpack.c.b16 %v2786, %v2784
    %v2905 = vpack.c.b16 %v2789, %v2787
    %v2906 = vpack.c.b16 %v2790, %v2788
    %v2907 = vpack.c.b16 %v2793, %v2791
    %v2908 = vpack.c.b16 %v2794, %v2792
    %v2909 = vpack.c.b16 %v2797, %v2795
    %v2910 = vpack.c.b16 %v2798, %v2796
    %v2911 = vpack.c.b16 %v2801, %v2799
    %v2912 = vpack.c.b16 %v2802, %v2800
    %v2913 = vpack.c.b16 %v2805, %v2803
    %v2914 = vpack.c.b16 %v2806, %v2804
    %v2915 = vpack.c.b16 %v2809, %v2807
    %v2916 = vpack.c.b16 %v2810, %v2808
    %v2917 = vpack.c.b16 %v2813, %v2811
    %v2918 = vpack.c.b16 %v2814, %v2812
    %v2919 = vpack.c.b16 %v2817, %v2815
    %v2920 = vpack.c.b16 %v2818, %v2816
    %v2921 = vpack.c.b16 %v2821, %v2819
    %v2922 = vpack.c.b16 %v2822, %v2820
    %v2923 = vpack.c.b16 %v2825, %v2823
    %v2924 = vpack.c.b16 %v2826, %v2824
    %v2925 = vpack.c.b16 %v2829, %v2827
    %v2926 = vpack.c.b16 %v2830, %v2828
    %v2927 = vpack.c.b16 %v2833, %v2831
    %v2928 = vpack.c.b16 %v2834, %v2832
    %v2929 = vpack.c.b16 %v2837, %v2835
    %v2930 = vpack.c.b16 %v2838, %v2836
    %v2931 = vpack.c.b16 %v2841, %v2839
    %v2932 = vpack.c.b16 %v2842, %v2840
    %v2933 = vpack.c.b16 %v2845, %v2843
    %v2934 = vpack.c.b16 %v2846, %v2844
    %v2935 = vpack.c.b16 %v2849, %v2847
    %v2936 = vpack.c.b16 %v2850, %v2848
    %v2937 = vpack.c.b16 %v2853, %v2851
    %v2938 = vpack.c.b16 %v2854, %v2852
    %v2939 = vpack.c.b16 %v2857, %v2855
    %v2940 = vpack.c.b16 %v2858, %v2856
    %v2941 = vpack.c.b16 %v2861, %v2859
    %v2942 = vpack.c.b16 %v2862, %v2860
    %v2943 = vpack.c.b16 %v2865, %v2863
    %v2944 = vpack.c.b16 %v2866, %v2864
    %v2945 = vpack.c.b16 %v2869, %v2867
    %v2946 = vpack.c.b16 %v2870, %v2868
    %v2947 = vpack.c.b16 %v2873, %v2871
    %v2948 = vpack.c.b16 %v2874, %v2872
    %v2949 = vpack.c.b16 %v2877, %v2875
    %v2950 = vpack.c.b16 %v2878, %v2876
    %v2951 = vpack.c.b16 %v2881, %v2879
    %v2952 = vpack.c.b16 %v2882, %v2880
    %v2953 = vpack.c.b16 %v2885, %v2883
    %v2954 = vpack.c.b16 %v2886, %v2884
    %v2955 = vpack.c.b16 %v2889, %v2887
    %v2956 = vpack.c.b16 %v2890, %v2888
    %v2957 = vpack.c.b16 %v2893, %v2891
    %v2958 = vpack.c.b16 %v2894, %v2892
    %3023 = vmatprep.subr.bf16.mxu0 %v2896
    %3024 = vmatpush1.bf16.msra.mxu0 %v2895
    %3025 = vmatprep.subr.bf16.mxu0 %v2898
    %3026 = vmatpush1.bf16.msra.mxu0 %v2897
    %3027 = vmatprep.subr.bf16.mxu0 %v2900
    %3028 = vmatpush1.bf16.msra.mxu0 %v2899
    %3029 = vmatprep.subr.bf16.mxu0 %v2902
    %3030 = vmatpush1.bf16.msra.mxu0 %v2901
    %3031 = vmatprep.subr.bf16.mxu0 %v2904
    %3032 = vmatpush1.bf16.msra.mxu0 %v2903
    %3033 = vmatprep.subr.bf16.mxu0 %v2906
    %3034 = vmatpush1.bf16.msra.mxu0 %v2905
    %3035 = vmatprep.subr.bf16.mxu0 %v2908
    %3036 = vmatpush1.bf16.msra.mxu0 %v2907
    %3037 = vmatprep.subr.bf16.mxu0 %v2910
    %3038 = vmatpush1.bf16.msra.mxu0 %v2909
    %3039 = vmatprep.subr.bf16.mxu0 %v2912
    %3040 = vmatpush1.bf16.msra.mxu0 %v2911
    %3041 = vmatprep.subr.bf16.mxu0 %v2914
    %3042 = vmatpush1.bf16.msra.mxu0 %v2913
    %3043 = vmatprep.subr.bf16.mxu0 %v2916
    %3044 = vmatpush1.bf16.msra.mxu0 %v2915
    %3045 = vmatprep.subr.bf16.mxu0 %v2918
    %3046 = vmatpush1.bf16.msra.mxu0 %v2917
    %3047 = vmatprep.subr.bf16.mxu0 %v2920
    %3048 = vmatpush1.bf16.msra.mxu0 %v2919
    %3049 = vmatprep.subr.bf16.mxu0 %v2922
    %3050 = vmatpush1.bf16.msra.mxu0 %v2921
    %3051 = vmatprep.subr.bf16.mxu0 %v2924
    %3052 = vmatpush1.bf16.msra.mxu0 %v2923
    %3053 = vmatprep.subr.bf16.mxu0 %v2926
    %3054 = vmatpush1.bf16.msra.mxu0 %v2925
    %3055 = vmatprep.mubr.bf16.mxu0 %v2624
    %3056 = vmatmul.mubr.bf16.gmra.mrb[0].mxu0 %v2623
    %v3057 = vpop.f32.mrb[0].mxu0
    %v3058 = vadd.f32 %v2696, %v3057
    %v3059 = vpop.f32.mrb[0].mxu0
    %v3060 = vadd.f32 %v2700, %v3059
    %v3061 = vpop.f32.mrb[0].mxu0
    %v3062 = vpop.f32.mrb[0].mxu0
    %3063 = vdwg.mxu0
    %3064 = vmatprep.subr.bf16.mxu0 %v2928
    %3065 = vmatpush1.bf16.msra.mxu0 %v2927
    %3066 = vmatprep.subr.bf16.mxu0 %v2930
    %3067 = vmatpush1.bf16.msra.mxu0 %v2929
    %3068 = vmatprep.subr.bf16.mxu0 %v2932
    %3069 = vmatpush1.bf16.msra.mxu0 %v2931
    %3070 = vmatprep.subr.bf16.mxu0 %v2934
    %3071 = vmatpush1.bf16.msra.mxu0 %v2933
    %3072 = vmatprep.subr.bf16.mxu0 %v2936
    %3073 = vmatpush1.bf16.msra.mxu0 %v2935
    %3074 = vmatprep.subr.bf16.mxu0 %v2938
    %3075 = vmatpush1.bf16.msra.mxu0 %v2937
    %3076 = vmatprep.subr.bf16.mxu0 %v2940
    %3077 = vmatpush1.bf16.msra.mxu0 %v2939
    %3078 = vmatprep.subr.bf16.mxu0 %v2942
    %3079 = vmatpush1.bf16.msra.mxu0 %v2941
    %3080 = vmatprep.subr.bf16.mxu0 %v2944
    %3081 = vmatpush1.bf16.msra.mxu0 %v2943
    %3082 = vmatprep.subr.bf16.mxu0 %v2946
    %3083 = vmatpush1.bf16.msra.mxu0 %v2945
    %3084 = vmatprep.subr.bf16.mxu0 %v2948
    %3085 = vmatpush1.bf16.msra.mxu0 %v2947
    %3086 = vmatprep.subr.bf16.mxu0 %v2950
    %3087 = vmatpush1.bf16.msra.mxu0 %v2949
    %3088 = vmatprep.subr.bf16.mxu0 %v2952
    %3089 = vmatpush1.bf16.msra.mxu0 %v2951
    %3090 = vmatprep.subr.bf16.mxu0 %v2954
    %3091 = vmatpush1.bf16.msra.mxu0 %v2953
    %3092 = vmatprep.subr.bf16.mxu0 %v2956
    %3093 = vmatpush1.bf16.msra.mxu0 %v2955
    %3094 = vmatprep.subr.bf16.mxu0 %v2958
    %3095 = vmatpush1.bf16.msra.mxu0 %v2957
    %3096 = vmatprep.mubr.bf16.mxu0 %v2626
    %3097 = vmatmul.mubr.bf16.gmra.mrb[0].mxu0 %v2625
    %v3098 = vpop.f32.mrb[0].mxu0
    %v3099 = vadd.f32 %v3058, %v3098
    %v3100 = vpop.f32.mrb[0].mxu0
    %v3101 = vadd.f32 %v3060, %v3100
    %v3102 = vpop.f32.mrb[0].mxu0
    %v3103 = vpop.f32.mrb[0].mxu0
    %3104 = vdwg.mxu0
    %vm3105 = vcmp.gt.f32.partialorder %v3099, 0.0
    %vm3106 = vcmp.gt.f32.partialorder %v3101, 0.0
    %v3107 = vmul.f32 %v3099, 0.2
    %v3108 = vmul.f32 %v3101, 0.2
    %v3109 = vsel %vm3105, %v3099, %v3107
    %v3110 = vsel %vm3106, %v3101, %v3108
    %v3111 = vpack.c.bf16 %v3109, %v3109
    %v3112 = vpack.c.bf16 %v3110, %v3110
    %v3113 = vld [vmem:[#allocation8] sm:$0xf]
    %v3114 = vld [vmem:[#allocation8 + $0x4] sm:$0xf]
    %v3115 = vld [vmem:[#allocation8 + $0x8] sm:$0xf]
    %v3116 = vld [vmem:[#allocation8 + $0xc] sm:$0xf]
    %v3117 = vld [vmem:[#allocation8 + $0x10] sm:$0xf]
    %v3118 = vld [vmem:[#allocation8 + $0x14] sm:$0xf]
    %v3119 = vld [vmem:[#allocation8 + $0x18] sm:$0xf]
    %v3120 = vld [vmem:[#allocation8 + $0x1c] sm:$0xf]
    %v3121 = vld [vmem:[#allocation8 + $0x20] sm:$0xf]
    %v3122 = vld [vmem:[#allocation8 + $0x24] sm:$0xf]
    %v3123 = vld [vmem:[#allocation8 + $0x28] sm:$0xf]
    %v3124 = vld [vmem:[#allocation8 + $0x2c] sm:$0xf]
    %v3125 = vld [vmem:[#allocation8 + $0x30] sm:$0xf]
    %v3126 = vld [vmem:[#allocation8 + $0x34] sm:$0xf]
    %v3127 = vld [vmem:[#allocation8 + $0x38] sm:$0xf]
    %v3128 = vld [vmem:[#allocation8 + $0x3c] sm:$0xf]
    %v3129 = vld [vmem:[#allocation8 + $0x40] sm:$0xf]
    %v3130 = vld [vmem:[#allocation8 + $0x44] sm:$0xf]
    %v3131 = vld [vmem:[#allocation8 + $0x48] sm:$0xf]
    %v3132 = vld [vmem:[#allocation8 + $0x4c] sm:$0xf]
    %v3133 = vld [vmem:[#allocation8 + $0x50] sm:$0xf]
    %v3134 = vld [vmem:[#allocation8 + $0x54] sm:$0xf]
    %v3135 = vld [vmem:[#allocation8 + $0x58] sm:$0xf]
    %v3136 = vld [vmem:[#allocation8 + $0x5c] sm:$0xf]
    %v3137 = vld [vmem:[#allocation8 + $0x60] sm:$0xf]
    %v3138 = vld [vmem:[#allocation8 + $0x64] sm:$0xf]
    %v3139 = vld [vmem:[#allocation8 + $0x68] sm:$0xf]
    %v3140 = vld [vmem:[#allocation8 + $0x6c] sm:$0xf]
    %v3141 = vld [vmem:[#allocation8 + $0x70] sm:$0xf]
    %v3142 = vld [vmem:[#allocation8 + $0x74] sm:$0xf]
    %v3143 = vld [vmem:[#allocation8 + $0x78] sm:$0xf]
    %v3144 = vld [vmem:[#allocation8 + $0x7c] sm:$0xf]
    %v3145 = vld [vmem:[%s8] sm:$0x1]
    %v3147 = vlaneseq
    %v3148 = vshrl.u32 %v3147, 7
    %v3149 = vsub.s32 0, %v3148
    %v3150 = vrot.slane %v3145, %v3149
    %v3184 = vunpack.c.l.b16 %v3113
    %v3185 = vunpack.c.l.b16 %v3114
    %v3186 = vunpack.c.l.b16 %v3115
    %v3187 = vunpack.c.l.b16 %v3116
    %v3188 = vunpack.c.l.b16 %v3117
    %v3189 = vunpack.c.l.b16 %v3118
    %v3190 = vunpack.c.l.b16 %v3119
    %v3191 = vunpack.c.l.b16 %v3120
    %v3192 = vunpack.c.l.b16 %v3121
    %v3193 = vunpack.c.l.b16 %v3122
    %v3194 = vunpack.c.l.b16 %v3123
    %v3195 = vunpack.c.l.b16 %v3124
    %v3196 = vunpack.c.l.b16 %v3125
    %v3197 = vunpack.c.l.b16 %v3126
    %v3198 = vunpack.c.l.b16 %v3127
    %v3199 = vunpack.c.l.b16 %v3128
    %v3200 = vunpack.c.l.b16 %v3129
    %v3201 = vunpack.c.l.b16 %v3130
    %v3202 = vunpack.c.l.b16 %v3131
    %v3203 = vunpack.c.l.b16 %v3132
    %v3204 = vunpack.c.l.b16 %v3133
    %v3205 = vunpack.c.l.b16 %v3134
    %v3206 = vunpack.c.l.b16 %v3135
    %v3207 = vunpack.c.l.b16 %v3136
    %v3208 = vunpack.c.l.b16 %v3137
    %v3209 = vunpack.c.l.b16 %v3138
    %v3210 = vunpack.c.l.b16 %v3139
    %v3211 = vunpack.c.l.b16 %v3140
    %v3212 = vunpack.c.l.b16 %v3141
    %v3213 = vunpack.c.l.b16 %v3142
    %v3214 = vunpack.c.l.b16 %v3143
    %v3215 = vunpack.c.l.b16 %v3144
    %v3216 = vpack.c.b16 %v3185, %v3184
    %v3217 = vpack.c.b16 %v3187, %v3186
    %v3218 = vpack.c.b16 %v3189, %v3188
    %v3219 = vpack.c.b16 %v3191, %v3190
    %v3220 = vpack.c.b16 %v3193, %v3192
    %v3221 = vpack.c.b16 %v3195, %v3194
    %v3222 = vpack.c.b16 %v3197, %v3196
    %v3223 = vpack.c.b16 %v3199, %v3198
    %v3224 = vpack.c.b16 %v3201, %v3200
    %v3225 = vpack.c.b16 %v3203, %v3202
    %v3226 = vpack.c.b16 %v3205, %v3204
    %v3227 = vpack.c.b16 %v3207, %v3206
    %v3228 = vpack.c.b16 %v3209, %v3208
    %v3229 = vpack.c.b16 %v3211, %v3210
    %v3230 = vpack.c.b16 %v3213, %v3212
    %v3231 = vpack.c.b16 %v3215, %v3214
    %3248 = vmatprep.subr.bf16.mxu0 0
    %3249 = vmatpush1.bf16.msra.mxu0 %v3216
    %3250 = vmatprep.subr.bf16.mxu0 0
    %3251 = vmatpush1.bf16.msra.mxu0 %v3217
    %3252 = vmatprep.subr.bf16.mxu0 0
    %3253 = vmatpush1.bf16.msra.mxu0 %v3218
    %3254 = vmatprep.subr.bf16.mxu0 0
    %3255 = vmatpush1.bf16.msra.mxu0 %v3219
    %3256 = vmatprep.subr.bf16.mxu0 0
    %3257 = vmatpush1.bf16.msra.mxu0 %v3220
    %3258 = vmatprep.subr.bf16.mxu0 0
    %3259 = vmatpush1.bf16.msra.mxu0 %v3221
    %3260 = vmatprep.subr.bf16.mxu0 0
    %3261 = vmatpush1.bf16.msra.mxu0 %v3222
    %3262 = vmatprep.subr.bf16.mxu0 0
    %3263 = vmatpush1.bf16.msra.mxu0 %v3223
    %3264 = vmatprep.subr.bf16.mxu0 0
    %3265 = vmatpush1.bf16.msra.mxu0 %v3224
    %3266 = vmatprep.subr.bf16.mxu0 0
    %3267 = vmatpush1.bf16.msra.mxu0 %v3225
    %3268 = vmatprep.subr.bf16.mxu0 0
    %3269 = vmatpush1.bf16.msra.mxu0 %v3226
    %3270 = vmatprep.subr.bf16.mxu0 0
    %3271 = vmatpush1.bf16.msra.mxu0 %v3227
    %3272 = vmatprep.subr.bf16.mxu0 0
    %3273 = vmatpush1.bf16.msra.mxu0 %v3228
    %3274 = vmatprep.subr.bf16.mxu0 0
    %3275 = vmatpush1.bf16.msra.mxu0 %v3229
    %3276 = vmatprep.subr.bf16.mxu0 0
    %3277 = vmatpush1.bf16.msra.mxu0 %v3230
    %3278 = vmatprep.subr.bf16.mxu0 0
    %3279 = vmatpush1.bf16.msra.mxu0 %v3231
    %3280 = vmatprep.mubr.bf16.mxu0 %v3112
    %3281 = vmatmul.mubr.bf16.gmra.mrb[0].mxu0 %v3111
    %v3282 = vpop.f32.mrb[0].mxu0
    %v3283 = vadd.f32 %v3150, %v3282
    %v3284 = vpop.f32.mrb[0].mxu0
    %v3285 = vpop.f32.mrb[0].mxu0
    %v3286 = vpop.f32.mrb[0].mxu0
    %3287 = vdwg.mxu0
    %vm3288 = vcmp.gt.f32.partialorder %v3283, 0.0
    %v3289 = vmul.f32 %v3283, 0.2
    %v3290 = vsel %vm3288, %v3283, %v3289
    %v3291 = vpack.c.bf16 %v3290, %v3290
    %v3292 = vld [vmem:[%s9] sm:$0xf]
    %v3293 = vld [vmem:[%s9 + $0x4] sm:$0xf]
    %v3294 = vld [vmem:[%s9 + $0x8] sm:$0xf]
    %v3295 = vld [vmem:[%s9 + $0xc] sm:$0xf]
    %v3296 = vld [vmem:[%s9 + $0x10] sm:$0xf]
    %v3297 = vld [vmem:[%s9 + $0x14] sm:$0xf]
    %v3298 = vld [vmem:[%s9 + $0x18] sm:$0xf]
    %v3299 = vld [vmem:[%s9 + $0x1c] sm:$0xf]
    %v3300 = vld [vmem:[%s9 + $0x20] sm:$0xf]
    %v3301 = vld [vmem:[%s9 + $0x24] sm:$0xf]
    %v3302 = vld [vmem:[%s9 + $0x28] sm:$0xf]
    %v3303 = vld [vmem:[%s9 + $0x2c] sm:$0xf]
    %v3304 = vld [vmem:[%s9 + $0x30] sm:$0xf]
    %v3305 = vld [vmem:[%s9 + $0x34] sm:$0xf]
    %v3306 = vld [vmem:[%s9 + $0x38] sm:$0xf]
    %v3307 = vld [vmem:[%s9 + $0x3c] sm:$0xf]
    %v3308 = vld [vmem:[%s10] sm:$0x1]
    %v3310 = vlaneseq
    %v3311 = vshrl.u32 %v3310, 7
    %v3312 = vsub.s32 0, %v3311
    %v3313 = vrot.slane %v3308, %v3312
    %v3331 = vunpack.c.l.b16 %v3292
    %v3332 = vunpack.c.l.b16 %v3293
    %v3333 = vunpack.c.l.b16 %v3294
    %v3334 = vunpack.c.l.b16 %v3295
    %v3335 = vunpack.c.l.b16 %v3296
    %v3336 = vunpack.c.l.b16 %v3297
    %v3337 = vunpack.c.l.b16 %v3298
    %v3338 = vunpack.c.l.b16 %v3299
    %v3339 = vunpack.c.l.b16 %v3300
    %v3340 = vunpack.c.l.b16 %v3301
    %v3341 = vunpack.c.l.b16 %v3302
    %v3342 = vunpack.c.l.b16 %v3303
    %v3343 = vunpack.c.l.b16 %v3304
    %v3344 = vunpack.c.l.b16 %v3305
    %v3345 = vunpack.c.l.b16 %v3306
    %v3346 = vunpack.c.l.b16 %v3307
    %v3347 = vpack.c.b16 %v3332, %v3331
    %v3348 = vpack.c.b16 %v3334, %v3333
    %v3349 = vpack.c.b16 %v3336, %v3335
    %v3350 = vpack.c.b16 %v3338, %v3337
    %v3351 = vpack.c.b16 %v3340, %v3339
    %v3352 = vpack.c.b16 %v3342, %v3341
    %v3353 = vpack.c.b16 %v3344, %v3343
    %v3354 = vpack.c.b16 %v3346, %v3345
    %3363 = vmatprep.subr.bf16.mxu0 0
    %3364 = vmatpush1.bf16.msra.mxu0 %v3347
    %3365 = vmatprep.subr.bf16.mxu0 0
    %3366 = vmatpush1.bf16.msra.mxu0 %v3348
    %3367 = vmatprep.subr.bf16.mxu0 0
    %3368 = vmatpush1.bf16.msra.mxu0 %v3349
    %3369 = vmatprep.subr.bf16.mxu0 0
    %3370 = vmatpush1.bf16.msra.mxu0 %v3350
    %3371 = vmatprep.subr.bf16.mxu0 0
    %3372 = vmatpush1.bf16.msra.mxu0 %v3351
    %3373 = vmatprep.subr.bf16.mxu0 0
    %3374 = vmatpush1.bf16.msra.mxu0 %v3352
    %3375 = vmatprep.subr.bf16.mxu0 0
    %3376 = vmatpush1.bf16.msra.mxu0 %v3353
    %3377 = vmatprep.subr.bf16.mxu0 0
    %3378 = vmatpush1.bf16.msra.mxu0 %v3354
    %3379 = vmatprep.subr.bf16.mxu0 0
    %3380 = vmatpush1.bf16.msra.mxu0 0
    %3381 = vmatprep.subr.bf16.mxu0 0
    %3382 = vmatpush1.bf16.msra.mxu0 0
    %3383 = vmatprep.subr.bf16.mxu0 0
    %3384 = vmatpush1.bf16.msra.mxu0 0
    %3385 = vmatprep.subr.bf16.mxu0 0
    %3386 = vmatpush1.bf16.msra.mxu0 0
    %3387 = vmatprep.subr.bf16.mxu0 0
    %3388 = vmatpush1.bf16.msra.mxu0 0
    %3389 = vmatprep.subr.bf16.mxu0 0
    %3390 = vmatpush1.bf16.msra.mxu0 0
    %3391 = vmatprep.subr.bf16.mxu0 0
    %3392 = vmatpush1.bf16.msra.mxu0 0
    %3393 = vmatprep.subr.bf16.mxu0 0
    %3394 = vmatpush1.bf16.msra.mxu0 0
    %3395 = vmatprep.mubr.bf16.mxu0 0
    %3396 = vmatmul.mubr.bf16.gmra.mrb[0].mxu0 %v3291
    %v3397 = vpop.f32.mrb[0].mxu0
    %v3398 = vadd.f32 %v3313, %v3397
    %v3399 = vpop.f32.mrb[0].mxu0
    %v3400 = vpop.f32.mrb[0].mxu0
    %v3401 = vpop.f32.mrb[0].mxu0
    %3402 = vdwg.mxu0
    %vm3403 = vcmp.gt.f32.partialorder %v3398, 0.0
    %v3404 = vmul.f32 %v3398, 0.2
    %v3405 = vsel %vm3403, %v3398, %v3404
    %v3406 = vpack.c.bf16 %v3405, %v3405
    %v3407 = vld [vmem:[%s11] sm:$0xf]
    %v3408 = vld [vmem:[%s11 + $0x4] sm:$0xf]
    %v3409 = vld [vmem:[%s11 + $0x8] sm:$0xf]
    %v3410 = vld [vmem:[%s11 + $0xc] sm:$0xf]
    %v3411 = vld [vmem:[%s11 + $0x10] sm:$0xf]
    %v3412 = vld [vmem:[%s11 + $0x14] sm:$0xf]
    %v3413 = vld [vmem:[%s11 + $0x18] sm:$0xf]
    %v3414 = vld [vmem:[%s11 + $0x1c] sm:$0xf]
    %v3415 = vld [vmem:[%s12] sm:$0x1]
    %v3417 = vlaneseq
    %v3418 = vshrl.u32 %v3417, 7
    %v3419 = vsub.s32 0, %v3418
    %v3420 = vrot.slane %v3415, %v3419
    %v3430 = vunpack.c.l.b16 %v3407
    %v3431 = vunpack.c.l.b16 %v3408
    %v3432 = vunpack.c.l.b16 %v3409
    %v3433 = vunpack.c.l.b16 %v3410
    %v3434 = vunpack.c.l.b16 %v3411
    %v3435 = vunpack.c.l.b16 %v3412
    %v3436 = vunpack.c.l.b16 %v3413
    %v3437 = vunpack.c.l.b16 %v3414
    %v3438 = vpack.c.b16 %v3431, %v3430
    %v3439 = vpack.c.b16 %v3433, %v3432
    %v3440 = vpack.c.b16 %v3435, %v3434
    %v3441 = vpack.c.b16 %v3437, %v3436
    %vm3446 = vcmask 523264
    %v3448 = vsel %vm3446, %v3406, 0
    %3450 = vmatprep.subr.bf16.mxu0 0
    %3451 = vmatpush1.bf16.msra.mxu0 %v3438
    %3452 = vmatprep.subr.bf16.mxu0 0
    %3453 = vmatpush1.bf16.msra.mxu0 %v3439
    %3454 = vmatprep.subr.bf16.mxu0 0
    %3455 = vmatpush1.bf16.msra.mxu0 %v3440
    %3456 = vmatprep.subr.bf16.mxu0 0
    %3457 = vmatpush1.bf16.msra.mxu0 %v3441
    %3458 = vmatprep.subr.bf16.mxu0 0
    %3459 = vmatpush1.bf16.msra.mxu0 0
    %3460 = vmatprep.subr.bf16.mxu0 0
    %3461 = vmatpush1.bf16.msra.mxu0 0
    %3462 = vmatprep.subr.bf16.mxu0 0
    %3463 = vmatpush1.bf16.msra.mxu0 0
    %3464 = vmatprep.subr.bf16.mxu0 0
    %3465 = vmatpush1.bf16.msra.mxu0 0
    %3466 = vmatprep.subr.bf16.mxu0 0
    %3467 = vmatpush1.bf16.msra.mxu0 0
    %3468 = vmatprep.subr.bf16.mxu0 0
    %3469 = vmatpush1.bf16.msra.mxu0 0
    %3470 = vmatprep.subr.bf16.mxu0 0
    %3471 = vmatpush1.bf16.msra.mxu0 0
    %3472 = vmatprep.subr.bf16.mxu0 0
    %3473 = vmatpush1.bf16.msra.mxu0 0
    %3474 = vmatprep.subr.bf16.mxu0 0
    %3475 = vmatpush1.bf16.msra.mxu0 0
    %3476 = vmatprep.subr.bf16.mxu0 0
    %3477 = vmatpush1.bf16.msra.mxu0 0
    %3478 = vmatprep.subr.bf16.mxu0 0
    %3479 = vmatpush1.bf16.msra.mxu0 0
    %3480 = vmatprep.subr.bf16.mxu0 0
    %3481 = vmatpush1.bf16.msra.mxu0 0
    %3482 = vmatprep.mubr.bf16.mxu0 0
    %3483 = vmatmul.mubr.bf16.gmra.mrb[0].mxu0 %v3448
    %v3484 = vpop.f32.mrb[0].mxu0
    %v3485 = vadd.f32 %v3420, %v3484
    %v3486 = vpop.f32.mrb[0].mxu0
    %v3487 = vpop.f32.mrb[0].mxu0
    %v3488 = vpop.f32.mrb[0].mxu0
    %3489 = vdwg.mxu0
    %3490 = vst [vmem:[#allocation10] sm:$0xff] %v3485
    // Predicated region
    $region70: #{tpu_custom_call.1} parent=1 // pred_check
      _
    $region71: #{tpu_custom_call.1} parent=1 // pred_check_branch
      %3492 = sbr.rel (0) target = $region73
    $region72: #{tpu_custom_call.1} parent=1 // pred_region
      %s3494 = ssub.s32 128, 128
      %3495 = vsyncadd [#allocation4], %s3494
      %s3497 = sshll.u32 [#allocation10], 4
      %s3498 = int_to_ptr.vmem [resolvable:$true] %s3497
      %3500 = dma.vmem_to_hbm [thread:$0]  %s3498, 128, %s13, [#allocation4]
    $region73: #{tpu_custom_call.1} parent=1 // pred_fallthru
      _
    // Predicated region
    $region74: #{tpu_custom_call.1} parent=1 // pred_check
      _
    $region75: #{tpu_custom_call.1} parent=1 // pred_check_branch
      %3502 = sbr.rel (0) target = $region77
    $region76: #{tpu_custom_call.1} parent=1 // pred_region
      %3503 = dma.done [#allocation4], 128
    $region77: #{tpu_custom_call.1} parent=1 // pred_fallthru
      _
    %3504 = vsyncpa [#allocation3], 1
    %3505 = vsyncpa [#allocation6], 1
    %3506 = vsyncpa [#allocation9], 1
    %3507 = vsyncpa [#allocation4], 1

</llo_original>
